<compile_context>
chip_gen: v6e
topology: v6e:2x2x1
jax: 0.10.0
libtpu: 0.0.40
codegen_flags: <defaults>
</compile_context>

<pallas_src>
import functools
import math

import jax
import jax.numpy as jnp
from jax import lax
from jax.experimental import pallas as pl
from jax.experimental.pallas import tpu as pltpu

H = 64            # LSTM hidden size per direction (fixed by the PyTorch module)
HG = 128          # one gate group: [fwd 0:64 | bwd 64:128] -> full 128-lane group
G = 4 * HG        # all gates [i, f, g, o] for both directions = 512 lanes
N_CLASSES = 6
CP = 128          # padded class dim -> lane-dense output stores
HID = 64          # MLP hidden width
HIDP = 128        # padded MLP hidden width


# ----------------------------- Pallas kernel --------------------------------

def bilstm_kernel(emb_ref,    # (T, Bt, E)    bf16
                  wih_ref,    # (E, G)        bf16   [i|f|g|o] x [fwd|bwd] interleaved
                  b_ref,      # (1, G)        f32    b_ih + b_hh, same packing
                  whh_ref,    # (HG, G)       bf16   per-gate block diag (fwd rows->fwd cols)
                  w1m_ref,    # (HG, HIDP)    bf16   mean-pool rows of linear
                  w1x_ref,    # (HG, HIDP)    bf16   max-pool rows of linear
                  b1_ref,     # (1, HIDP)     f32
                  w2_ref,     # (HIDP, CP)    bf16
                  b2_ref,     # (1, CP)       f32
                  out_ref,    # (Bt, CP)      f32
                  pre_ref):   # scratch (T, Bt, G) bf16: per-step gate preactivations
    T, Bt, E = emb_ref.shape

    # ---- hoisted input projection, chunked over time so the f32 matmul
    # temporary stays ~<=2 MiB (keeps v7x's 64 MiB VMEM happy at big tiles).
    t_chunk = max(1, min(T, (2 * 1024 * 1024) // (Bt * G * 4)))
    for t0 in range(0, T, t_chunk):
        t1 = min(T, t0 + t_chunk)
        x = emb_ref[t0:t1].reshape((t1 - t0) * Bt, E)                    # bf16
        pre = jnp.dot(x, wih_ref[...], preferred_element_type=jnp.float32)
        pre_ref[t0:t1] = (pre + b_ref[...]).astype(jnp.bfloat16).reshape(
            t1 - t0, Bt, G)

    # Lane mask selecting the fwd half (first H lanes) of every 128-lane gate
    # group; hoisted out of the loop (broadcasts inside loops are not CSE'd).
    lane = lax.broadcasted_iota(jnp.int32, (Bt, G), 1)
    fwd_lane = (lane & (HG - 1)) < H

    zeros = jnp.zeros((Bt, HG), jnp.float32)
    # Safe: T >= 1 (asserted in the wrapper) and every lane is real, so the max
    # becomes finite after step 0.
    neg_inf = jnp.full((Bt, HG), -jnp.inf, jnp.float32)

    def step(t, carry):
        h, c, s, m = carry                       # (Bt, HG) f32, lanes = [h_fwd | h_bwd]
        # Fused fwd+bwd recurrent matmul; whh is block-diagonal within each gate
        # group so the two directions stay independent.
        # TODO(synk): hold whh in MXU weight registers across the loop via
        # pltpu.matmul_push_rhs/acc_lhs/pop once their tile constraints are
        # verified; jnp.dot re-streams the 128 KiB whh each step.
        rec = jnp.dot(h.astype(jnp.bfloat16), whh_ref[...],
                      preferred_element_type=jnp.float32)               # (Bt, G)
        # fwd lanes consume x_t, bwd lanes consume x_{T-1-t}.
        xg = jnp.where(fwd_lane,
                       pre_ref[t].astype(jnp.float32),
                       pre_ref[T - 1 - t].astype(jnp.float32))
        gates = xg + rec
        i_f = jax.nn.sigmoid(gates[:, 0:2 * HG])      # i and f gates only
        o = jax.nn.sigmoid(gates[:, 3 * HG:4 * HG])   # o gate only (no EUP on g)
        g = jnp.tanh(gates[:, 2 * HG:3 * HG])
        c_new = i_f[:, HG:] * c + i_f[:, :HG] * g
        h_new = o * jnp.tanh(c_new)
        # mean/max pooling is order-invariant, so pooling the bwd states in
        # reversed visit order is exact.
        return (h_new, c_new, s + h_new, jnp.maximum(m, h_new))

    if T <= 16:
        unroll = True                 # short loop: fully unroll
    elif T % 4 == 0:
        unroll = 4
    elif T % 2 == 0:
        unroll = 2
    else:
        unroll = 1
    _, _, s_cat, m_cat = lax.fori_loop(0, T, step,
                                       (zeros, zeros, zeros, neg_inf),
                                       unroll=unroll)

    # ---- pooled features -> MLP head (w1 pre-split into mean/max row blocks,
    # so no lane concat is needed).
    mean_cat = s_cat * jnp.float32(1.0 / T)
    hidden = (jnp.dot(mean_cat.astype(jnp.bfloat16), w1m_ref[...],
                      preferred_element_type=jnp.float32)
              + jnp.dot(m_cat.astype(jnp.bfloat16), w1x_ref[...],
                        preferred_element_type=jnp.float32)
              + b1_ref[...])
    hidden = jnp.maximum(hidden, 0.0)
    # TODO(synk): nn.Dropout(0.1) is identity at inference; training-mode
    # dropout is not implemented.
    logits = (jnp.dot(hidden.astype(jnp.bfloat16), w2_ref[...],
                      preferred_element_type=jnp.float32) + b2_ref[...])
    out_ref[...] = logits.astype(out_ref.dtype)


# --------------------- weight repack (PyTorch -> kernel) ---------------------

def _prep_kernel_weights(params):
    """Pad/transpose PyTorch-layout weights into MXU-friendly kernel operands.

    Gate packing: column block g*128:(g+1)*128 holds gate g in [i, f, g, o],
    with fwd weights in the first 64 lanes and bwd weights in the last 64.
    """
    E = params["wih_f"].shape[1]

    def pack_ih(wf, wb):            # (4H, E) each -> (E, G)
        out = jnp.zeros((E, G), jnp.float32)
        for gt in range(4):
            out = out.at[:, gt * HG:gt * HG + H].set(wf[gt * H:(gt + 1) * H, :].T)
            out = out.at[:, gt * HG + H:(gt + 1) * HG].set(wb[gt * H:(gt + 1) * H, :].T)
        return out

    def pack_bias(bf, bb):          # (4H,) each (already b_ih+b_hh) -> (1, G)
        out = jnp.zeros((1, G), jnp.float32)
        for gt in range(4):
            out = out.at[0, gt * HG:gt * HG + H].set(bf[gt * H:(gt + 1) * H])
            out = out.at[0, gt * HG + H:(gt + 1) * HG].set(bb[gt * H:(gt + 1) * H])
        return out

    def pack_hh(wf, wb):            # (4H, H) each -> (HG, G), block-diag per gate
        out = jnp.zeros((HG, G), jnp.float32)
        for gt in range(4):
            out = out.at[:H, gt * HG:gt * HG + H].set(wf[gt * H:(gt + 1) * H, :].T)
            out = out.at[H:, gt * HG + H:(gt + 1) * HG].set(wb[gt * H:(gt + 1) * H, :].T)
        return out

    wih = pack_ih(params["wih_f"], params["wih_b"])
    bias = pack_bias(params["b_ih_f"] + params["b_hh_f"],
                     params["b_ih_b"] + params["b_hh_b"])
    whh = pack_hh(params["whh_f"], params["whh_b"])

    # Pooled features (Bt, HG) = [h_fwd 0:64 | h_bwd 64:128] == PyTorch's
    # h_lstm feature order, so w1 columns map directly: cols 0:128 -> mean path,
    # cols 128:256 -> max path.
    w1 = params["w1"]                                   # (HID, 4H)
    w1m = jnp.zeros((HG, HIDP), jnp.float32).at[:, :HID].set(w1[:, :2 * H].T)
    w1x = jnp.zeros((HG, HIDP), jnp.float32).at[:, :HID].set(w1[:, 2 * H:].T)
    b1 = jnp.zeros((1, HIDP), jnp.float32).at[0, :HID].set(params["b1"])
    w2 = jnp.zeros((HIDP, CP), jnp.float32).at[:HID, :N_CLASSES].set(params["w2"].T)
    b2 = jnp.zeros((1, CP), jnp.float32).at[0, :N_CLASSES].set(params["b2"])

    bf16 = jnp.bfloat16
    return (wih.astype(bf16), bias, whh.astype(bf16),
            w1m.astype(bf16), w1x.astype(bf16), b1, w2.astype(bf16), b2)


# ------------------------------- wrapper -------------------------------------

def _round_up(x, m):
    return ((x + m - 1) // m) * m


def bilstm_forward(x_ids, params, *, b_tile=128):
    """x_ids: (B, T) int32 token ids.  Returns (B, N_CLASSES) float32 logits."""
    B, T = x_ids.shape
    assert T >= 1, "pooling over time requires T >= 1"
    E = params["embedding"].shape[1]

    # Large batch tiles amortize the weight-bound recurrence; clamp to the
    # padded batch so tiny batches don't pay for dead rows.  On v7x (2 TCs)
    # pick b_tile ~= ceil(B/2) rounded to 8 so both cores get a tile.
    b_tile = max(8, min(_round_up(b_tile, 8), _round_up(B, 8)))
    b_pad = _round_up(B, b_tile)
    n_tiles = b_pad // b_tile

    wih, bias, whh, w1m, w1x, b1, w2, b2 = _prep_kernel_weights(params)

    # Embedding lookup stays in XLA but gathers straight into the time-major
    # (T, b_pad, E) bf16 layout the kernel wants: no transpose of the big
    # activation and half the HBM bytes vs f32.
    # TODO(synk): for large vocabularies move the gather into the kernel
    # (scalar-prefetched ids + manual row DMA from pl.ANY).
    ids = jnp.pad(x_ids, ((0, b_pad - B), (0, 0)))
    emb = jnp.take(params["embedding"].astype(jnp.bfloat16), ids.T, axis=0)

    rep = lambda b: (0, 0)      # grid-invariant (replicated) weight blocks
    # TODO(synk): single-buffer these invariant specs (pipeline_mode=pl.Buffered(1))
    # to reclaim the duplicated weight VMEM once that kwarg is validated here.
    in_specs = [
        pl.BlockSpec((T, b_tile, E), lambda b: (0, b, 0)),
        pl.BlockSpec((E, G), rep),
        pl.BlockSpec((1, G), rep),
        pl.BlockSpec((HG, G), rep),
        pl.BlockSpec((HG, HIDP), rep),
        pl.BlockSpec((HG, HIDP), rep),
        pl.BlockSpec((1, HIDP), rep),
        pl.BlockSpec((HIDP, CP), rep),
        pl.BlockSpec((1, CP), rep),
    ]
    out_specs = pl.BlockSpec((b_tile, CP), lambda b: (b, 0))
    scratch_shapes = [pltpu.VMEM((T, b_tile, G), jnp.bfloat16)]   # bf16 pregates

    weight_bytes = sum(int(w.size) * w.dtype.itemsize
                       for w in (wih, bias, whh, w1m, w1x, b1, w2, b2))
    flops_per_tile = (2 * T * b_tile * E * G            # hoisted input projection
                      + 2 * T * b_tile * HG * G         # fused fwd+bwd recurrence
                      + 2 * b_tile * HG * HIDP * 2      # head layer 1 (mean+max)
                      + 2 * b_tile * HIDP * CP)         # head layer 2
    cost = pl.CostEstimate(
        flops=int(n_tiles * flops_per_tile),
        transcendentals=int(n_tiles * T * b_tile * 5 * HG),  # sigmoid(i,f,o)+2*tanh
        bytes_accessed=int(int(emb.size) * 2 + n_tiles * weight_bytes
                           + b_pad * CP * 4))

    proj_tmp = min(T * b_tile * G * 4, 4 << 20)          # chunked f32 proj temporary
    vmem_need = (2 * T * b_tile * E * 2                  # double-buffered emb tile
                 + 2 * weight_bytes                      # weights (double-buffered)
                 + T * b_tile * G * 2                    # bf16 pregates scratch
                 + proj_tmp
                 + 6 * b_tile * HG * 4                   # h/c/sum/max carries + slack
                 + 2 * b_tile * CP * 4)                  # output tile
    # Generation-aware VMEM budget: ~3/4 of physical (96 MiB on v5e/v6e,
    # 48 MiB on v7x); v7x-safe fallback if the query is unavailable.
    try:
        cap = getattr(pltpu.get_tpu_info(), "vmem_capacity_bytes", None)
    except Exception:
        cap = None
    cap = (int(cap) * 3 // 4) if cap else (48 << 20)
    vmem_limit = int(min(max(2 * vmem_need, 16 << 20), max(cap, 16 << 20)))

    out = pl.pallas_call(
        bilstm_kernel,
        out_shape=jax.ShapeDtypeStruct((b_pad, CP), jnp.float32),
        grid=(n_tiles,),
        in_specs=in_specs,
        out_specs=out_specs,
        scratch_shapes=scratch_shapes,
        compiler_params=pltpu.CompilerParams(
            dimension_semantics=("parallel",),   # independent batch tiles (v7x: 2 TCs)
            vmem_limit_bytes=vmem_limit),
        cost_estimate=cost,
    )(emb, wih, bias, whh, w1m, w1x, b1, w2, b2)

    return out[:B, :N_CLASSES]


# --------------------------- parameter creation ------------------------------

def make_params(key, max_features, embed_size):
    ks = jax.random.split(key, 13)
    u = lambda k, shape, bound: jax.random.uniform(
        k, shape, jnp.float32, -bound, bound)
    stdv = 1.0 / math.sqrt(H)
    s1 = 1.0 / math.sqrt(4 * H)
    s2 = 1.0 / math.sqrt(HID)
    return {
        # frozen embedding matrix (stands in for `embedding_matrix`)
        "embedding": jax.random.normal(ks[0], (max_features, embed_size),
                                       jnp.float32),
        # PyTorch nn.LSTM layout: weight (4H, in), gate order [i, f, g, o]
        "wih_f": u(ks[1], (4 * H, embed_size), stdv),
        "whh_f": u(ks[2], (4 * H, H), stdv),
        "b_ih_f": u(ks[3], (4 * H,), stdv),
        "b_hh_f": u(ks[4], (4 * H,), stdv),
        "wih_b": u(ks[5], (4 * H, embed_size), stdv),
        "whh_b": u(ks[6], (4 * H, H), stdv),
        "b_ih_b": u(ks[7], (4 * H,), stdv),
        "b_hh_b": u(ks[8], (4 * H,), stdv),
        # linear(4H -> 64) and out(64 -> 6), PyTorch (out, in) layout
        "w1": u(ks[9], (HID, 4 * H), s1),
        "b1": u(ks[10], (HID,), s1),
        "w2": u(ks[11], (N_CLASSES, HID), s2),
        "b2": u(ks[12], (N_CLASSES,), s2),
    }


# --------------------------------- main ---------------------------------------

if __name__ == "__main__":
    MAX_FEATURES = 100
    EMBED_SIZE = 32
    B, T = 2, 8

    key = jax.random.PRNGKey(0)
    k_params, k_ids = jax.random.split(key)

    params = make_params(k_params, MAX_FEATURES, EMBED_SIZE)
    x_ids = jax.random.randint(k_ids, (B, T), 0, MAX_FEATURES, jnp.int32)

    out = jax.jit(functools.partial(bilstm_forward, params=params))(x_ids)
    out = jax.block_until_ready(out)
    assert out.shape == (B, N_CLASSES) and out.dtype == jnp.float32
    assert bool(jnp.all(jnp.isfinite(out)))
    print("KERNEL_OK")
</pallas_src>

<mosaic_0001>
module attributes {stable_mosaic.version = 11 : i64} {
  func.func @bilstm_kernel(%arg0: i32, %arg1: memref<8x8x32xbf16, #tpu.memory_space<vmem>>, %arg2: memref<32x512xbf16, #tpu.memory_space<vmem>>, %arg3: memref<1x512xf32, #tpu.memory_space<vmem>>, %arg4: memref<128x512xbf16, #tpu.memory_space<vmem>>, %arg5: memref<128x128xbf16, #tpu.memory_space<vmem>>, %arg6: memref<128x128xbf16, #tpu.memory_space<vmem>>, %arg7: memref<1x128xf32, #tpu.memory_space<vmem>>, %arg8: memref<128x128xbf16, #tpu.memory_space<vmem>>, %arg9: memref<1x128xf32, #tpu.memory_space<vmem>>, %arg10: memref<8x128xf32, #tpu.memory_space<vmem>>, %arg11: memref<8x8x512xbf16, #tpu.memory_space<vmem>>) attributes {dimension_semantics = [#tpu.dimension_semantics<parallel>], iteration_bounds = array<i64: 1>, scalar_prefetch = 0 : i64, scratch_operands = 1 : i64, tpu.core_type = #tpu.core_type<tc>, window_params = [{transform_indices = @transform_0, window_bounds = array<i64: 8, 8, 32>}, {pipeline_mode = #tpu.pipeline_mode<synchronous>, transform_indices = @transform_1, window_bounds = array<i64: 32, 512>}, {pipeline_mode = #tpu.pipeline_mode<synchronous>, transform_indices = @transform_2, window_bounds = array<i64: 1, 512>}, {pipeline_mode = #tpu.pipeline_mode<synchronous>, transform_indices = @transform_3, window_bounds = array<i64: 128, 512>}, {pipeline_mode = #tpu.pipeline_mode<synchronous>, transform_indices = @transform_4, window_bounds = array<i64: 128, 128>}, {pipeline_mode = #tpu.pipeline_mode<synchronous>, transform_indices = @transform_5, window_bounds = array<i64: 128, 128>}, {pipeline_mode = #tpu.pipeline_mode<synchronous>, transform_indices = @transform_6, window_bounds = array<i64: 1, 128>}, {pipeline_mode = #tpu.pipeline_mode<synchronous>, transform_indices = @transform_7, window_bounds = array<i64: 128, 128>}, {pipeline_mode = #tpu.pipeline_mode<synchronous>, transform_indices = @transform_8, window_bounds = array<i64: 1, 128>}, {transform_indices = @transform_9, window_bounds = array<i64: 8, 128>}]} {
    %c0 = arith.constant 0 : index
    %c0_0 = arith.constant 0 : index
    %c0_1 = arith.constant 0 : index
    %0 = vector.load %arg1[%c0, %c0_0, %c0_1] : memref<8x8x32xbf16, #tpu.memory_space<vmem>>, vector<8x8x32xbf16>
    %1 = vector.shape_cast %0 : vector<8x8x32xbf16> to vector<64x32xbf16>
    %c0_2 = arith.constant 0 : index
    %c0_3 = arith.constant 0 : index
    %2 = vector.load %arg2[%c0_2, %c0_3] : memref<32x512xbf16, #tpu.memory_space<vmem>>, vector<32x512xbf16>
    %cst = arith.constant dense<0.000000e+00> : vector<64x512xf32>
    %3 = tpu.matmul %1, %2, %cst {dimension_numbers = #tpu.dot_dimension_numbers<[1], [0], [0], [1], [0, 0, 1, 1], [], []>} : vector<64x32xbf16>, vector<32x512xbf16>, vector<64x512xf32> -> vector<64x512xf32>
    %c0_4 = arith.constant 0 : index
    %c0_5 = arith.constant 0 : index
    %4 = vector.load %arg3[%c0_4, %c0_5] : memref<1x512xf32, #tpu.memory_space<vmem>>, vector<1x512xf32>
    %5 = vector.broadcast %4 : vector<1x512xf32> to vector<64x512xf32>
    %6 = arith.addf %3, %5 : vector<64x512xf32>
    %7 = arith.truncf %6 : vector<64x512xf32> to vector<64x512xbf16>
    %8 = vector.shape_cast %7 : vector<64x512xbf16> to vector<8x8x512xbf16>
    %c0_6 = arith.constant 0 : index
    %c0_7 = arith.constant 0 : index
    %c0_8 = arith.constant 0 : index
    %9 = vector.load %arg11[%c0_6, %c0_7, %c0_8] : memref<8x8x512xbf16, #tpu.memory_space<vmem>>, vector<8x8x512xbf16>
    tpu.vector_store %arg11[%c0_6, %c0_7, %c0_8], %8 {strides = array<i32>} : memref<8x8x512xbf16, #tpu.memory_space<vmem>>, vector<8x8x512xbf16>,
    %10 = tpu.iota {dimensions = array<i32: 1>} : vector<8x512xi32>
    %c127_i32 = arith.constant 127 : i32
    %11 = vector.broadcast %c127_i32 : i32 to vector<8x512xi32>
    %12 = arith.andi %10, %11 : vector<8x512xi32>
    %c64_i32 = arith.constant 64 : i32
    %13 = vector.broadcast %c64_i32 : i32 to vector<8x512xi32>
    %14 = arith.cmpi slt, %12, %13 : vector<8x512xi32>
    %cst_9 = arith.constant 0.000000e+00 : f32
    %15 = vector.broadcast %cst_9 : f32 to vector<8x128xf32>
    %cst_10 = arith.constant 0xFF800000 : f32
    %16 = vector.broadcast %cst_10 : f32 to vector<8x128xf32>
    %c0_i32 = arith.constant 0 : i32
    %17 = arith.truncf %15 : vector<8x128xf32> to vector<8x128xbf16>
    %c0_11 = arith.constant 0 : index
    %c0_12 = arith.constant 0 : index
    %18 = vector.load %arg4[%c0_11, %c0_12] : memref<128x512xbf16, #tpu.memory_space<vmem>>, vector<128x512xbf16>
    %cst_13 = arith.constant dense<0.000000e+00> : vector<8x512xf32>
    %19 = tpu.matmul %17, %18, %cst_13 {dimension_numbers = #tpu.dot_dimension_numbers<[1], [0], [0], [1], [0, 0, 1, 1], [], []>} : vector<8x128xbf16>, vector<128x512xbf16>, vector<8x512xf32> -> vector<8x512xf32>
    %20 = arith.index_cast %c0_i32 : i32 to index
    %c0_14 = arith.constant 0 : index
    %c0_15 = arith.constant 0 : index
    %21 = vector.load %arg11[%20, %c0_14, %c0_15] : memref<8x8x512xbf16, #tpu.memory_space<vmem>>, vector<1x8x512xbf16>
    %22 = vector.shape_cast %21 : vector<1x8x512xbf16> to vector<8x512xbf16>
    %23 = arith.extf %22 : vector<8x512xbf16> to vector<8x512xf32>
    %c7_i32 = arith.constant 7 : i32
    %24 = arith.subi %c7_i32, %c0_i32 : i32
    %25 = arith.index_cast %24 : i32 to index
    %c0_16 = arith.constant 0 : index
    %c0_17 = arith.constant 0 : index
    %26 = vector.load %arg11[%25, %c0_16, %c0_17] : memref<8x8x512xbf16, #tpu.memory_space<vmem>>, vector<1x8x512xbf16>
    %27 = vector.shape_cast %26 : vector<1x8x512xbf16> to vector<8x512xbf16>
    %28 = arith.extf %27 : vector<8x512xbf16> to vector<8x512xf32>
    %29 = arith.select %14, %23, %28 : vector<8x512xi1>, vector<8x512xf32>
    %30 = arith.addf %29, %19 : vector<8x512xf32>
    %31 = vector.extract_strided_slice %30 {offsets = [0, 0], sizes = [8, 256], strides = [1, 1]} : vector<8x512xf32> to vector<8x256xf32>
    %32 = arith.negf %31 : vector<8x256xf32>
    %33 = math.exp %32 : vector<8x256xf32>
    %cst_18 = arith.constant 1.000000e+00 : f32
    %34 = vector.broadcast %cst_18 : f32 to vector<8x256xf32>
    %35 = arith.addf %34, %33 : vector<8x256xf32>
    %36 = arith.divf %34, %35 : vector<8x256xf32>
    %37 = vector.extract_strided_slice %30 {offsets = [0, 384], sizes = [8, 128], strides = [1, 1]} : vector<8x512xf32> to vector<8x128xf32>
    %38 = arith.negf %37 : vector<8x128xf32>
    %39 = math.exp %38 : vector<8x128xf32>
    %cst_19 = arith.constant 1.000000e+00 : f32
    %40 = vector.broadcast %cst_19 : f32 to vector<8x128xf32>
    %41 = arith.addf %40, %39 : vector<8x128xf32>
    %42 = arith.divf %40, %41 : vector<8x128xf32>
    %43 = vector.extract_strided_slice %30 {offsets = [0, 256], sizes = [8, 128], strides = [1, 1]} : vector<8x512xf32> to vector<8x128xf32>
    %44 = math.tanh %43 : vector<8x128xf32>
    %45 = vector.extract_strided_slice %36 {offsets = [0, 128], sizes = [8, 128], strides = [1, 1]} : vector<8x256xf32> to vector<8x128xf32>
    %46 = arith.mulf %45, %15 : vector<8x128xf32>
    %47 = vector.extract_strided_slice %36 {offsets = [0, 0], sizes = [8, 128], strides = [1, 1]} : vector<8x256xf32> to vector<8x128xf32>
    %48 = arith.mulf %47, %44 : vector<8x128xf32>
    %49 = arith.addf %46, %48 : vector<8x128xf32>
    %50 = math.tanh %49 : vector<8x128xf32>
    %51 = arith.mulf %42, %50 : vector<8x128xf32>
    %52 = arith.addf %15, %51 : vector<8x128xf32>
    %53 = arith.maximumf %16, %51 : vector<8x128xf32>
    %c1_i32 = arith.constant 1 : i32
    %54 = arith.truncf %51 : vector<8x128xf32> to vector<8x128xbf16>
    %c0_20 = arith.constant 0 : index
    %c0_21 = arith.constant 0 : index
    %55 = vector.load %arg4[%c0_20, %c0_21] : memref<128x512xbf16, #tpu.memory_space<vmem>>, vector<128x512xbf16>
    %cst_22 = arith.constant dense<0.000000e+00> : vector<8x512xf32>
    %56 = tpu.matmul %54, %55, %cst_22 {dimension_numbers = #tpu.dot_dimension_numbers<[1], [0], [0], [1], [0, 0, 1, 1], [], []>} : vector<8x128xbf16>, vector<128x512xbf16>, vector<8x512xf32> -> vector<8x512xf32>
    %57 = arith.index_cast %c1_i32 : i32 to index
    %c0_23 = arith.constant 0 : index
    %c0_24 = arith.constant 0 : index
    %58 = vector.load %arg11[%57, %c0_23, %c0_24] : memref<8x8x512xbf16, #tpu.memory_space<vmem>>, vector<1x8x512xbf16>
    %59 = vector.shape_cast %58 : vector<1x8x512xbf16> to vector<8x512xbf16>
    %60 = arith.extf %59 : vector<8x512xbf16> to vector<8x512xf32>
    %c7_i32_25 = arith.constant 7 : i32
    %61 = arith.subi %c7_i32_25, %c1_i32 : i32
    %62 = arith.index_cast %61 : i32 to index
    %c0_26 = arith.constant 0 : index
    %c0_27 = arith.constant 0 : index
    %63 = vector.load %arg11[%62, %c0_26, %c0_27] : memref<8x8x512xbf16, #tpu.memory_space<vmem>>, vector<1x8x512xbf16>
    %64 = vector.shape_cast %63 : vector<1x8x512xbf16> to vector<8x512xbf16>
    %65 = arith.extf %64 : vector<8x512xbf16> to vector<8x512xf32>
    %66 = arith.select %14, %60, %65 : vector<8x512xi1>, vector<8x512xf32>
    %67 = arith.addf %66, %56 : vector<8x512xf32>
    %68 = vector.extract_strided_slice %67 {offsets = [0, 0], sizes = [8, 256], strides = [1, 1]} : vector<8x512xf32> to vector<8x256xf32>
    %69 = arith.negf %68 : vector<8x256xf32>
    %70 = math.exp %69 : vector<8x256xf32>
    %cst_28 = arith.constant 1.000000e+00 : f32
    %71 = vector.broadcast %cst_28 : f32 to vector<8x256xf32>
    %72 = arith.addf %71, %70 : vector<8x256xf32>
    %73 = arith.divf %71, %72 : vector<8x256xf32>
    %74 = vector.extract_strided_slice %67 {offsets = [0, 384], sizes = [8, 128], strides = [1, 1]} : vector<8x512xf32> to vector<8x128xf32>
    %75 = arith.negf %74 : vector<8x128xf32>
    %76 = math.exp %75 : vector<8x128xf32>
    %cst_29 = arith.constant 1.000000e+00 : f32
    %77 = vector.broadcast %cst_29 : f32 to vector<8x128xf32>
    %78 = arith.addf %77, %76 : vector<8x128xf32>
    %79 = arith.divf %77, %78 : vector<8x128xf32>
    %80 = vector.extract_strided_slice %67 {offsets = [0, 256], sizes = [8, 128], strides = [1, 1]} : vector<8x512xf32> to vector<8x128xf32>
    %81 = math.tanh %80 : vector<8x128xf32>
    %82 = vector.extract_strided_slice %73 {offsets = [0, 128], sizes = [8, 128], strides = [1, 1]} : vector<8x256xf32> to vector<8x128xf32>
    %83 = arith.mulf %82, %49 : vector<8x128xf32>
    %84 = vector.extract_strided_slice %73 {offsets = [0, 0], sizes = [8, 128], strides = [1, 1]} : vector<8x256xf32> to vector<8x128xf32>
    %85 = arith.mulf %84, %81 : vector<8x128xf32>
    %86 = arith.addf %83, %85 : vector<8x128xf32>
    %87 = math.tanh %86 : vector<8x128xf32>
    %88 = arith.mulf %79, %87 : vector<8x128xf32>
    %89 = arith.addf %52, %88 : vector<8x128xf32>
    %90 = arith.maximumf %53, %88 : vector<8x128xf32>
    %c2_i32 = arith.constant 2 : i32
    %91 = arith.truncf %88 : vector<8x128xf32> to vector<8x128xbf16>
    %c0_30 = arith.constant 0 : index
    %c0_31 = arith.constant 0 : index
    %92 = vector.load %arg4[%c0_30, %c0_31] : memref<128x512xbf16, #tpu.memory_space<vmem>>, vector<128x512xbf16>
    %cst_32 = arith.constant dense<0.000000e+00> : vector<8x512xf32>
    %93 = tpu.matmul %91, %92, %cst_32 {dimension_numbers = #tpu.dot_dimension_numbers<[1], [0], [0], [1], [0, 0, 1, 1], [], []>} : vector<8x128xbf16>, vector<128x512xbf16>, vector<8x512xf32> -> vector<8x512xf32>
    %94 = arith.index_cast %c2_i32 : i32 to index
    %c0_33 = arith.constant 0 : index
    %c0_34 = arith.constant 0 : index
    %95 = vector.load %arg11[%94, %c0_33, %c0_34] : memref<8x8x512xbf16, #tpu.memory_space<vmem>>, vector<1x8x512xbf16>
    %96 = vector.shape_cast %95 : vector<1x8x512xbf16> to vector<8x512xbf16>
    %97 = arith.extf %96 : vector<8x512xbf16> to vector<8x512xf32>
    %c7_i32_35 = arith.constant 7 : i32
    %98 = arith.subi %c7_i32_35, %c2_i32 : i32
    %99 = arith.index_cast %98 : i32 to index
    %c0_36 = arith.constant 0 : index
    %c0_37 = arith.constant 0 : index
    %100 = vector.load %arg11[%99, %c0_36, %c0_37] : memref<8x8x512xbf16, #tpu.memory_space<vmem>>, vector<1x8x512xbf16>
    %101 = vector.shape_cast %100 : vector<1x8x512xbf16> to vector<8x512xbf16>
    %102 = arith.extf %101 : vector<8x512xbf16> to vector<8x512xf32>
    %103 = arith.select %14, %97, %102 : vector<8x512xi1>, vector<8x512xf32>
    %104 = arith.addf %103, %93 : vector<8x512xf32>
    %105 = vector.extract_strided_slice %104 {offsets = [0, 0], sizes = [8, 256], strides = [1, 1]} : vector<8x512xf32> to vector<8x256xf32>
    %106 = arith.negf %105 : vector<8x256xf32>
    %107 = math.exp %106 : vector<8x256xf32>
    %cst_38 = arith.constant 1.000000e+00 : f32
    %108 = vector.broadcast %cst_38 : f32 to vector<8x256xf32>
    %109 = arith.addf %108, %107 : vector<8x256xf32>
    %110 = arith.divf %108, %109 : vector<8x256xf32>
    %111 = vector.extract_strided_slice %104 {offsets = [0, 384], sizes = [8, 128], strides = [1, 1]} : vector<8x512xf32> to vector<8x128xf32>
    %112 = arith.negf %111 : vector<8x128xf32>
    %113 = math.exp %112 : vector<8x128xf32>
    %cst_39 = arith.constant 1.000000e+00 : f32
    %114 = vector.broadcast %cst_39 : f32 to vector<8x128xf32>
    %115 = arith.addf %114, %113 : vector<8x128xf32>
    %116 = arith.divf %114, %115 : vector<8x128xf32>
    %117 = vector.extract_strided_slice %104 {offsets = [0, 256], sizes = [8, 128], strides = [1, 1]} : vector<8x512xf32> to vector<8x128xf32>
    %118 = math.tanh %117 : vector<8x128xf32>
    %119 = vector.extract_strided_slice %110 {offsets = [0, 128], sizes = [8, 128], strides = [1, 1]} : vector<8x256xf32> to vector<8x128xf32>
    %120 = arith.mulf %119, %86 : vector<8x128xf32>
    %121 = vector.extract_strided_slice %110 {offsets = [0, 0], sizes = [8, 128], strides = [1, 1]} : vector<8x256xf32> to vector<8x128xf32>
    %122 = arith.mulf %121, %118 : vector<8x128xf32>
    %123 = arith.addf %120, %122 : vector<8x128xf32>
    %124 = math.tanh %123 : vector<8x128xf32>
    %125 = arith.mulf %116, %124 : vector<8x128xf32>
    %126 = arith.addf %89, %125 : vector<8x128xf32>
    %127 = arith.maximumf %90, %125 : vector<8x128xf32>
    %c3_i32 = arith.constant 3 : i32
    %128 = arith.truncf %125 : vector<8x128xf32> to vector<8x128xbf16>
    %c0_40 = arith.constant 0 : index
    %c0_41 = arith.constant 0 : index
    %129 = vector.load %arg4[%c0_40, %c0_41] : memref<128x512xbf16, #tpu.memory_space<vmem>>, vector<128x512xbf16>
    %cst_42 = arith.constant dense<0.000000e+00> : vector<8x512xf32>
    %130 = tpu.matmul %128, %129, %cst_42 {dimension_numbers = #tpu.dot_dimension_numbers<[1], [0], [0], [1], [0, 0, 1, 1], [], []>} : vector<8x128xbf16>, vector<128x512xbf16>, vector<8x512xf32> -> vector<8x512xf32>
    %131 = arith.index_cast %c3_i32 : i32 to index
    %c0_43 = arith.constant 0 : index
    %c0_44 = arith.constant 0 : index
    %132 = vector.load %arg11[%131, %c0_43, %c0_44] : memref<8x8x512xbf16, #tpu.memory_space<vmem>>, vector<1x8x512xbf16>
    %133 = vector.shape_cast %132 : vector<1x8x512xbf16> to vector<8x512xbf16>
    %134 = arith.extf %133 : vector<8x512xbf16> to vector<8x512xf32>
    %c7_i32_45 = arith.constant 7 : i32
    %135 = arith.subi %c7_i32_45, %c3_i32 : i32
    %136 = arith.index_cast %135 : i32 to index
    %c0_46 = arith.constant 0 : index
    %c0_47 = arith.constant 0 : index
    %137 = vector.load %arg11[%136, %c0_46, %c0_47] : memref<8x8x512xbf16, #tpu.memory_space<vmem>>, vector<1x8x512xbf16>
    %138 = vector.shape_cast %137 : vector<1x8x512xbf16> to vector<8x512xbf16>
    %139 = arith.extf %138 : vector<8x512xbf16> to vector<8x512xf32>
    %140 = arith.select %14, %134, %139 : vector<8x512xi1>, vector<8x512xf32>
    %141 = arith.addf %140, %130 : vector<8x512xf32>
    %142 = vector.extract_strided_slice %141 {offsets = [0, 0], sizes = [8, 256], strides = [1, 1]} : vector<8x512xf32> to vector<8x256xf32>
    %143 = arith.negf %142 : vector<8x256xf32>
    %144 = math.exp %143 : vector<8x256xf32>
    %cst_48 = arith.constant 1.000000e+00 : f32
    %145 = vector.broadcast %cst_48 : f32 to vector<8x256xf32>
    %146 = arith.addf %145, %144 : vector<8x256xf32>
    %147 = arith.divf %145, %146 : vector<8x256xf32>
    %148 = vector.extract_strided_slice %141 {offsets = [0, 384], sizes = [8, 128], strides = [1, 1]} : vector<8x512xf32> to vector<8x128xf32>
    %149 = arith.negf %148 : vector<8x128xf32>
    %150 = math.exp %149 : vector<8x128xf32>
    %cst_49 = arith.constant 1.000000e+00 : f32
    %151 = vector.broadcast %cst_49 : f32 to vector<8x128xf32>
    %152 = arith.addf %151, %150 : vector<8x128xf32>
    %153 = arith.divf %151, %152 : vector<8x128xf32>
    %154 = vector.extract_strided_slice %141 {offsets = [0, 256], sizes = [8, 128], strides = [1, 1]} : vector<8x512xf32> to vector<8x128xf32>
    %155 = math.tanh %154 : vector<8x128xf32>
    %156 = vector.extract_strided_slice %147 {offsets = [0, 128], sizes = [8, 128], strides = [1, 1]} : vector<8x256xf32> to vector<8x128xf32>
    %157 = arith.mulf %156, %123 : vector<8x128xf32>
    %158 = vector.extract_strided_slice %147 {offsets = [0, 0], sizes = [8, 128], strides = [1, 1]} : vector<8x256xf32> to vector<8x128xf32>
    %159 = arith.mulf %158, %155 : vector<8x128xf32>
    %160 = arith.addf %157, %159 : vector<8x128xf32>
    %161 = math.tanh %160 : vector<8x128xf32>
    %162 = arith.mulf %153, %161 : vector<8x128xf32>
    %163 = arith.addf %126, %162 : vector<8x128xf32>
    %164 = arith.maximumf %127, %162 : vector<8x128xf32>
    %c4_i32 = arith.constant 4 : i32
    %165 = arith.truncf %162 : vector<8x128xf32> to vector<8x128xbf16>
    %c0_50 = arith.constant 0 : index
    %c0_51 = arith.constant 0 : index
    %166 = vector.load %arg4[%c0_50, %c0_51] : memref<128x512xbf16, #tpu.memory_space<vmem>>, vector<128x512xbf16>
    %cst_52 = arith.constant dense<0.000000e+00> : vector<8x512xf32>
    %167 = tpu.matmul %165, %166, %cst_52 {dimension_numbers = #tpu.dot_dimension_numbers<[1], [0], [0], [1], [0, 0, 1, 1], [], []>} : vector<8x128xbf16>, vector<128x512xbf16>, vector<8x512xf32> -> vector<8x512xf32>
    %168 = arith.index_cast %c4_i32 : i32 to index
    %c0_53 = arith.constant 0 : index
    %c0_54 = arith.constant 0 : index
    %169 = vector.load %arg11[%168, %c0_53, %c0_54] : memref<8x8x512xbf16, #tpu.memory_space<vmem>>, vector<1x8x512xbf16>
    %170 = vector.shape_cast %169 : vector<1x8x512xbf16> to vector<8x512xbf16>
    %171 = arith.extf %170 : vector<8x512xbf16> to vector<8x512xf32>
    %c7_i32_55 = arith.constant 7 : i32
    %172 = arith.subi %c7_i32_55, %c4_i32 : i32
    %173 = arith.index_cast %172 : i32 to index
    %c0_56 = arith.constant 0 : index
    %c0_57 = arith.constant 0 : index
    %174 = vector.load %arg11[%173, %c0_56, %c0_57] : memref<8x8x512xbf16, #tpu.memory_space<vmem>>, vector<1x8x512xbf16>
    %175 = vector.shape_cast %174 : vector<1x8x512xbf16> to vector<8x512xbf16>
    %176 = arith.extf %175 : vector<8x512xbf16> to vector<8x512xf32>
    %177 = arith.select %14, %171, %176 : vector<8x512xi1>, vector<8x512xf32>
    %178 = arith.addf %177, %167 : vector<8x512xf32>
    %179 = vector.extract_strided_slice %178 {offsets = [0, 0], sizes = [8, 256], strides = [1, 1]} : vector<8x512xf32> to vector<8x256xf32>
    %180 = arith.negf %179 : vector<8x256xf32>
    %181 = math.exp %180 : vector<8x256xf32>
    %cst_58 = arith.constant 1.000000e+00 : f32
    %182 = vector.broadcast %cst_58 : f32 to vector<8x256xf32>
    %183 = arith.addf %182, %181 : vector<8x256xf32>
    %184 = arith.divf %182, %183 : vector<8x256xf32>
    %185 = vector.extract_strided_slice %178 {offsets = [0, 384], sizes = [8, 128], strides = [1, 1]} : vector<8x512xf32> to vector<8x128xf32>
    %186 = arith.negf %185 : vector<8x128xf32>
    %187 = math.exp %186 : vector<8x128xf32>
    %cst_59 = arith.constant 1.000000e+00 : f32
    %188 = vector.broadcast %cst_59 : f32 to vector<8x128xf32>
    %189 = arith.addf %188, %187 : vector<8x128xf32>
    %190 = arith.divf %188, %189 : vector<8x128xf32>
    %191 = vector.extract_strided_slice %178 {offsets = [0, 256], sizes = [8, 128], strides = [1, 1]} : vector<8x512xf32> to vector<8x128xf32>
    %192 = math.tanh %191 : vector<8x128xf32>
    %193 = vector.extract_strided_slice %184 {offsets = [0, 128], sizes = [8, 128], strides = [1, 1]} : vector<8x256xf32> to vector<8x128xf32>
    %194 = arith.mulf %193, %160 : vector<8x128xf32>
    %195 = vector.extract_strided_slice %184 {offsets = [0, 0], sizes = [8, 128], strides = [1, 1]} : vector<8x256xf32> to vector<8x128xf32>
    %196 = arith.mulf %195, %192 : vector<8x128xf32>
    %197 = arith.addf %194, %196 : vector<8x128xf32>
    %198 = math.tanh %197 : vector<8x128xf32>
    %199 = arith.mulf %190, %198 : vector<8x128xf32>
    %200 = arith.addf %163, %199 : vector<8x128xf32>
    %201 = arith.maximumf %164, %199 : vector<8x128xf32>
    %c5_i32 = arith.constant 5 : i32
    %202 = arith.truncf %199 : vector<8x128xf32> to vector<8x128xbf16>
    %c0_60 = arith.constant 0 : index
    %c0_61 = arith.constant 0 : index
    %203 = vector.load %arg4[%c0_60, %c0_61] : memref<128x512xbf16, #tpu.memory_space<vmem>>, vector<128x512xbf16>
    %cst_62 = arith.constant dense<0.000000e+00> : vector<8x512xf32>
    %204 = tpu.matmul %202, %203, %cst_62 {dimension_numbers = #tpu.dot_dimension_numbers<[1], [0], [0], [1], [0, 0, 1, 1], [], []>} : vector<8x128xbf16>, vector<128x512xbf16>, vector<8x512xf32> -> vector<8x512xf32>
    %205 = arith.index_cast %c5_i32 : i32 to index
    %c0_63 = arith.constant 0 : index
    %c0_64 = arith.constant 0 : index
    %206 = vector.load %arg11[%205, %c0_63, %c0_64] : memref<8x8x512xbf16, #tpu.memory_space<vmem>>, vector<1x8x512xbf16>
    %207 = vector.shape_cast %206 : vector<1x8x512xbf16> to vector<8x512xbf16>
    %208 = arith.extf %207 : vector<8x512xbf16> to vector<8x512xf32>
    %c7_i32_65 = arith.constant 7 : i32
    %209 = arith.subi %c7_i32_65, %c5_i32 : i32
    %210 = arith.index_cast %209 : i32 to index
    %c0_66 = arith.constant 0 : index
    %c0_67 = arith.constant 0 : index
    %211 = vector.load %arg11[%210, %c0_66, %c0_67] : memref<8x8x512xbf16, #tpu.memory_space<vmem>>, vector<1x8x512xbf16>
    %212 = vector.shape_cast %211 : vector<1x8x512xbf16> to vector<8x512xbf16>
    %213 = arith.extf %212 : vector<8x512xbf16> to vector<8x512xf32>
    %214 = arith.select %14, %208, %213 : vector<8x512xi1>, vector<8x512xf32>
    %215 = arith.addf %214, %204 : vector<8x512xf32>
    %216 = vector.extract_strided_slice %215 {offsets = [0, 0], sizes = [8, 256], strides = [1, 1]} : vector<8x512xf32> to vector<8x256xf32>
    %217 = arith.negf %216 : vector<8x256xf32>
    %218 = math.exp %217 : vector<8x256xf32>
    %cst_68 = arith.constant 1.000000e+00 : f32
    %219 = vector.broadcast %cst_68 : f32 to vector<8x256xf32>
    %220 = arith.addf %219, %218 : vector<8x256xf32>
    %221 = arith.divf %219, %220 : vector<8x256xf32>
    %222 = vector.extract_strided_slice %215 {offsets = [0, 384], sizes = [8, 128], strides = [1, 1]} : vector<8x512xf32> to vector<8x128xf32>
    %223 = arith.negf %222 : vector<8x128xf32>
    %224 = math.exp %223 : vector<8x128xf32>
    %cst_69 = arith.constant 1.000000e+00 : f32
    %225 = vector.broadcast %cst_69 : f32 to vector<8x128xf32>
    %226 = arith.addf %225, %224 : vector<8x128xf32>
    %227 = arith.divf %225, %226 : vector<8x128xf32>
    %228 = vector.extract_strided_slice %215 {offsets = [0, 256], sizes = [8, 128], strides = [1, 1]} : vector<8x512xf32> to vector<8x128xf32>
    %229 = math.tanh %228 : vector<8x128xf32>
    %230 = vector.extract_strided_slice %221 {offsets = [0, 128], sizes = [8, 128], strides = [1, 1]} : vector<8x256xf32> to vector<8x128xf32>
    %231 = arith.mulf %230, %197 : vector<8x128xf32>
    %232 = vector.extract_strided_slice %221 {offsets = [0, 0], sizes = [8, 128], strides = [1, 1]} : vector<8x256xf32> to vector<8x128xf32>
    %233 = arith.mulf %232, %229 : vector<8x128xf32>
    %234 = arith.addf %231, %233 : vector<8x128xf32>
    %235 = math.tanh %234 : vector<8x128xf32>
    %236 = arith.mulf %227, %235 : vector<8x128xf32>
    %237 = arith.addf %200, %236 : vector<8x128xf32>
    %238 = arith.maximumf %201, %236 : vector<8x128xf32>
    %c6_i32 = arith.constant 6 : i32
    %239 = arith.truncf %236 : vector<8x128xf32> to vector<8x128xbf16>
    %c0_70 = arith.constant 0 : index
    %c0_71 = arith.constant 0 : index
    %240 = vector.load %arg4[%c0_70, %c0_71] : memref<128x512xbf16, #tpu.memory_space<vmem>>, vector<128x512xbf16>
    %cst_72 = arith.constant dense<0.000000e+00> : vector<8x512xf32>
    %241 = tpu.matmul %239, %240, %cst_72 {dimension_numbers = #tpu.dot_dimension_numbers<[1], [0], [0], [1], [0, 0, 1, 1], [], []>} : vector<8x128xbf16>, vector<128x512xbf16>, vector<8x512xf32> -> vector<8x512xf32>
    %242 = arith.index_cast %c6_i32 : i32 to index
    %c0_73 = arith.constant 0 : index
    %c0_74 = arith.constant 0 : index
    %243 = vector.load %arg11[%242, %c0_73, %c0_74] : memref<8x8x512xbf16, #tpu.memory_space<vmem>>, vector<1x8x512xbf16>
    %244 = vector.shape_cast %243 : vector<1x8x512xbf16> to vector<8x512xbf16>
    %245 = arith.extf %244 : vector<8x512xbf16> to vector<8x512xf32>
    %c7_i32_75 = arith.constant 7 : i32
    %246 = arith.subi %c7_i32_75, %c6_i32 : i32
    %247 = arith.index_cast %246 : i32 to index
    %c0_76 = arith.constant 0 : index
    %c0_77 = arith.constant 0 : index
    %248 = vector.load %arg11[%247, %c0_76, %c0_77] : memref<8x8x512xbf16, #tpu.memory_space<vmem>>, vector<1x8x512xbf16>
    %249 = vector.shape_cast %248 : vector<1x8x512xbf16> to vector<8x512xbf16>
    %250 = arith.extf %249 : vector<8x512xbf16> to vector<8x512xf32>
    %251 = arith.select %14, %245, %250 : vector<8x512xi1>, vector<8x512xf32>
    %252 = arith.addf %251, %241 : vector<8x512xf32>
    %253 = vector.extract_strided_slice %252 {offsets = [0, 0], sizes = [8, 256], strides = [1, 1]} : vector<8x512xf32> to vector<8x256xf32>
    %254 = arith.negf %253 : vector<8x256xf32>
    %255 = math.exp %254 : vector<8x256xf32>
    %cst_78 = arith.constant 1.000000e+00 : f32
    %256 = vector.broadcast %cst_78 : f32 to vector<8x256xf32>
    %257 = arith.addf %256, %255 : vector<8x256xf32>
    %258 = arith.divf %256, %257 : vector<8x256xf32>
    %259 = vector.extract_strided_slice %252 {offsets = [0, 384], sizes = [8, 128], strides = [1, 1]} : vector<8x512xf32> to vector<8x128xf32>
    %260 = arith.negf %259 : vector<8x128xf32>
    %261 = math.exp %260 : vector<8x128xf32>
    %cst_79 = arith.constant 1.000000e+00 : f32
    %262 = vector.broadcast %cst_79 : f32 to vector<8x128xf32>
    %263 = arith.addf %262, %261 : vector<8x128xf32>
    %264 = arith.divf %262, %263 : vector<8x128xf32>
    %265 = vector.extract_strided_slice %252 {offsets = [0, 256], sizes = [8, 128], strides = [1, 1]} : vector<8x512xf32> to vector<8x128xf32>
    %266 = math.tanh %265 : vector<8x128xf32>
    %267 = vector.extract_strided_slice %258 {offsets = [0, 128], sizes = [8, 128], strides = [1, 1]} : vector<8x256xf32> to vector<8x128xf32>
    %268 = arith.mulf %267, %234 : vector<8x128xf32>
    %269 = vector.extract_strided_slice %258 {offsets = [0, 0], sizes = [8, 128], strides = [1, 1]} : vector<8x256xf32> to vector<8x128xf32>
    %270 = arith.mulf %269, %266 : vector<8x128xf32>
    %271 = arith.addf %268, %270 : vector<8x128xf32>
    %272 = math.tanh %271 : vector<8x128xf32>
    %273 = arith.mulf %264, %272 : vector<8x128xf32>
    %274 = arith.addf %237, %273 : vector<8x128xf32>
    %275 = arith.maximumf %238, %273 : vector<8x128xf32>
    %c7_i32_80 = arith.constant 7 : i32
    %276 = arith.truncf %273 : vector<8x128xf32> to vector<8x128xbf16>
    %c0_81 = arith.constant 0 : index
    %c0_82 = arith.constant 0 : index
    %277 = vector.load %arg4[%c0_81, %c0_82] : memref<128x512xbf16, #tpu.memory_space<vmem>>, vector<128x512xbf16>
    %cst_83 = arith.constant dense<0.000000e+00> : vector<8x512xf32>
    %278 = tpu.matmul %276, %277, %cst_83 {dimension_numbers = #tpu.dot_dimension_numbers<[1], [0], [0], [1], [0, 0, 1, 1], [], []>} : vector<8x128xbf16>, vector<128x512xbf16>, vector<8x512xf32> -> vector<8x512xf32>
    %279 = arith.index_cast %c7_i32_80 : i32 to index
    %c0_84 = arith.constant 0 : index
    %c0_85 = arith.constant 0 : index
    %280 = vector.load %arg11[%279, %c0_84, %c0_85] : memref<8x8x512xbf16, #tpu.memory_space<vmem>>, vector<1x8x512xbf16>
    %281 = vector.shape_cast %280 : vector<1x8x512xbf16> to vector<8x512xbf16>
    %282 = arith.extf %281 : vector<8x512xbf16> to vector<8x512xf32>
    %c7_i32_86 = arith.constant 7 : i32
    %283 = arith.subi %c7_i32_86, %c7_i32_80 : i32
    %284 = arith.index_cast %283 : i32 to index
    %c0_87 = arith.constant 0 : index
    %c0_88 = arith.constant 0 : index
    %285 = vector.load %arg11[%284, %c0_87, %c0_88] : memref<8x8x512xbf16, #tpu.memory_space<vmem>>, vector<1x8x512xbf16>
    %286 = vector.shape_cast %285 : vector<1x8x512xbf16> to vector<8x512xbf16>
    %287 = arith.extf %286 : vector<8x512xbf16> to vector<8x512xf32>
    %288 = arith.select %14, %282, %287 : vector<8x512xi1>, vector<8x512xf32>
    %289 = arith.addf %288, %278 : vector<8x512xf32>
    %290 = vector.extract_strided_slice %289 {offsets = [0, 0], sizes = [8, 256], strides = [1, 1]} : vector<8x512xf32> to vector<8x256xf32>
    %291 = arith.negf %290 : vector<8x256xf32>
    %292 = math.exp %291 : vector<8x256xf32>
    %cst_89 = arith.constant 1.000000e+00 : f32
    %293 = vector.broadcast %cst_89 : f32 to vector<8x256xf32>
    %294 = arith.addf %293, %292 : vector<8x256xf32>
    %295 = arith.divf %293, %294 : vector<8x256xf32>
    %296 = vector.extract_strided_slice %289 {offsets = [0, 384], sizes = [8, 128], strides = [1, 1]} : vector<8x512xf32> to vector<8x128xf32>
    %297 = arith.negf %296 : vector<8x128xf32>
    %298 = math.exp %297 : vector<8x128xf32>
    %cst_90 = arith.constant 1.000000e+00 : f32
    %299 = vector.broadcast %cst_90 : f32 to vector<8x128xf32>
    %300 = arith.addf %299, %298 : vector<8x128xf32>
    %301 = arith.divf %299, %300 : vector<8x128xf32>
    %302 = vector.extract_strided_slice %289 {offsets = [0, 256], sizes = [8, 128], strides = [1, 1]} : vector<8x512xf32> to vector<8x128xf32>
    %303 = math.tanh %302 : vector<8x128xf32>
    %304 = vector.extract_strided_slice %295 {offsets = [0, 128], sizes = [8, 128], strides = [1, 1]} : vector<8x256xf32> to vector<8x128xf32>
    %305 = arith.mulf %304, %271 : vector<8x128xf32>
    %306 = vector.extract_strided_slice %295 {offsets = [0, 0], sizes = [8, 128], strides = [1, 1]} : vector<8x256xf32> to vector<8x128xf32>
    %307 = arith.mulf %306, %303 : vector<8x128xf32>
    %308 = arith.addf %305, %307 : vector<8x128xf32>
    %309 = math.tanh %308 : vector<8x128xf32>
    %310 = arith.mulf %301, %309 : vector<8x128xf32>
    %311 = arith.addf %274, %310 : vector<8x128xf32>
    %312 = arith.maximumf %275, %310 : vector<8x128xf32>
    %c8_i32 = arith.constant 8 : i32
    %cst_91 = arith.constant 1.250000e-01 : f32
    %313 = vector.broadcast %cst_91 : f32 to vector<8x128xf32>
    %314 = arith.mulf %311, %313 : vector<8x128xf32>
    %315 = arith.truncf %314 : vector<8x128xf32> to vector<8x128xbf16>
    %c0_92 = arith.constant 0 : index
    %c0_93 = arith.constant 0 : index
    %316 = vector.load %arg5[%c0_92, %c0_93] : memref<128x128xbf16, #tpu.memory_space<vmem>>, vector<128x128xbf16>
    %cst_94 = arith.constant dense<0.000000e+00> : vector<8x128xf32>
    %317 = tpu.matmul %315, %316, %cst_94 {dimension_numbers = #tpu.dot_dimension_numbers<[1], [0], [0], [1], [0, 0, 1, 1], [], []>} : vector<8x128xbf16>, vector<128x128xbf16>, vector<8x128xf32> -> vector<8x128xf32>
    %318 = arith.truncf %312 : vector<8x128xf32> to vector<8x128xbf16>
    %c0_95 = arith.constant 0 : index
    %c0_96 = arith.constant 0 : index
    %319 = vector.load %arg6[%c0_95, %c0_96] : memref<128x128xbf16, #tpu.memory_space<vmem>>, vector<128x128xbf16>
    %cst_97 = arith.constant dense<0.000000e+00> : vector<8x128xf32>
    %320 = tpu.matmul %318, %319, %cst_97 {dimension_numbers = #tpu.dot_dimension_numbers<[1], [0], [0], [1], [0, 0, 1, 1], [], []>} : vector<8x128xbf16>, vector<128x128xbf16>, vector<8x128xf32> -> vector<8x128xf32>
    %321 = arith.addf %317, %320 : vector<8x128xf32>
    %c0_98 = arith.constant 0 : index
    %c0_99 = arith.constant 0 : index
    %322 = vector.load %arg7[%c0_98, %c0_99] : memref<1x128xf32, #tpu.memory_space<vmem>>, vector<1x128xf32>
    %323 = vector.broadcast %322 : vector<1x128xf32> to vector<8x128xf32>
    %324 = arith.addf %321, %323 : vector<8x128xf32>
    %cst_100 = arith.constant 0.000000e+00 : f32
    %325 = vector.broadcast %cst_100 : f32 to vector<8x128xf32>
    %326 = arith.maximumf %324, %325 : vector<8x128xf32>
    %327 = arith.truncf %326 : vector<8x128xf32> to vector<8x128xbf16>
    %c0_101 = arith.constant 0 : index
    %c0_102 = arith.constant 0 : index
    %328 = vector.load %arg8[%c0_101, %c0_102] : memref<128x128xbf16, #tpu.memory_space<vmem>>, vector<128x128xbf16>
    %cst_103 = arith.constant dense<0.000000e+00> : vector<8x128xf32>
    %329 = tpu.matmul %327, %328, %cst_103 {dimension_numbers = #tpu.dot_dimension_numbers<[1], [0], [0], [1], [0, 0, 1, 1], [], []>} : vector<8x128xbf16>, vector<128x128xbf16>, vector<8x128xf32> -> vector<8x128xf32>
    %c0_104 = arith.constant 0 : index
    %c0_105 = arith.constant 0 : index
    %330 = vector.load %arg9[%c0_104, %c0_105] : memref<1x128xf32, #tpu.memory_space<vmem>>, vector<1x128xf32>
    %331 = vector.broadcast %330 : vector<1x128xf32> to vector<8x128xf32>
    %332 = arith.addf %329, %331 : vector<8x128xf32>
    %c0_106 = arith.constant 0 : index
    %c0_107 = arith.constant 0 : index
    %333 = vector.load %arg10[%c0_106, %c0_107] : memref<8x128xf32, #tpu.memory_space<vmem>>, vector<8x128xf32>
    tpu.vector_store %arg10[%c0_106, %c0_107], %332 {strides = array<i32>} : memref<8x128xf32, #tpu.memory_space<vmem>>, vector<8x128xf32>,
    return
  }
  func.func @transform_0(%arg0: i32) -> (i32, i32, i32) {
    %c0_i32 = arith.constant 0 : i32
    %c0_i32_0 = arith.constant 0 : i32
    %c0_i32_1 = arith.constant 0 : i32
    return %c0_i32, %arg0, %c0_i32_0 : i32, i32, i32
  }
  func.func @transform_1(%arg0: i32) -> (i32, i32) {
    %c0_i32 = arith.constant 0 : i32
    %c0_i32_0 = arith.constant 0 : i32
    %c0_i32_1 = arith.constant 0 : i32
    return %c0_i32, %c0_i32_0 : i32, i32
  }
  func.func @transform_2(%arg0: i32) -> (i32, i32) {
    %c0_i32 = arith.constant 0 : i32
    %c0_i32_0 = arith.constant 0 : i32
    %c0_i32_1 = arith.constant 0 : i32
    return %c0_i32, %c0_i32_0 : i32, i32
  }
  func.func @transform_3(%arg0: i32) -> (i32, i32) {
    %c0_i32 = arith.constant 0 : i32
    %c0_i32_0 = arith.constant 0 : i32
    %c0_i32_1 = arith.constant 0 : i32
    return %c0_i32, %c0_i32_0 : i32, i32
  }
  func.func @transform_4(%arg0: i32) -> (i32, i32) {
    %c0_i32 = arith.constant 0 : i32
    %c0_i32_0 = arith.constant 0 : i32
    %c0_i32_1 = arith.constant 0 : i32
    return %c0_i32, %c0_i32_0 : i32, i32
  }
  func.func @transform_5(%arg0: i32) -> (i32, i32) {
    %c0_i32 = arith.constant 0 : i32
    %c0_i32_0 = arith.constant 0 : i32
    %c0_i32_1 = arith.constant 0 : i32
    return %c0_i32, %c0_i32_0 : i32, i32
  }
  func.func @transform_6(%arg0: i32) -> (i32, i32) {
    %c0_i32 = arith.constant 0 : i32
    %c0_i32_0 = arith.constant 0 : i32
    %c0_i32_1 = arith.constant 0 : i32
    return %c0_i32, %c0_i32_0 : i32, i32
  }
  func.func @transform_7(%arg0: i32) -> (i32, i32) {
    %c0_i32 = arith.constant 0 : i32
    %c0_i32_0 = arith.constant 0 : i32
    %c0_i32_1 = arith.constant 0 : i32
    return %c0_i32, %c0_i32_0 : i32, i32
  }
  func.func @transform_8(%arg0: i32) -> (i32, i32) {
    %c0_i32 = arith.constant 0 : i32
    %c0_i32_0 = arith.constant 0 : i32
    %c0_i32_1 = arith.constant 0 : i32
    return %c0_i32, %c0_i32_0 : i32, i32
  }
  func.func @transform_9(%arg0: i32) -> (i32, i32) {
    %c0_i32 = arith.constant 0 : i32
    %c0_i32_0 = arith.constant 0 : i32
    return %arg0, %c0_i32 : i32, i32
  }
}

</mosaic_0001>

<llo_original>
// kernel: bilstm_forward.1
$region0: #{bilstm_forward.1}
  #allocation0 [shape = 'u32[]', space=smem, size = 0x4, offset = 0x4, fixed_abs, tag = 'smem constant byte address 0x4 - core index']
  #allocation1 [shape = 'u32[144,128]{1,0:T(1,128)}', space=vmem, size = 0x12000, scoped, tag = 'internal scratch']
  #allocation2 [shape = 'bf16[8,8,512]{2,1,0:T(8,128)(2,1)}', space=vmem, size = 0x10000, scoped, tag = 'scratch operand']
  %s0 = inlined_call_operand.vmem [shape: bf16[8,8,32], index: 0, kind: input, shape index: {}]
  %s1 = inlined_call_operand.vmem [shape: bf16[32,512], index: 1, kind: input, shape index: {}]
  %s2 = inlined_call_operand.vmem [shape: f32[1,512], index: 2, kind: input, shape index: {}]
  %s3 = inlined_call_operand.vmem [shape: bf16[128,512], index: 3, kind: input, shape index: {}]
  %s4 = inlined_call_operand.vmem [shape: bf16[128,128], index: 4, kind: input, shape index: {}]
  %s5 = inlined_call_operand.vmem [shape: bf16[128,128], index: 5, kind: input, shape index: {}]
  %s6 = inlined_call_operand.vmem [shape: f32[1,128], index: 6, kind: input, shape index: {}]
  %s7 = inlined_call_operand.vmem [shape: bf16[128,128], index: 7, kind: input, shape index: {}]
  %s8 = inlined_call_operand.vmem [shape: f32[1,128], index: 8, kind: input, shape index: {}]
  %s9 = inlined_call_operand.vmem [shape: f32[8,128], index: 9, kind: output, shape index: {}]
  %s10 = sld [smem:[#allocation0]]
  $region46: #{bilstm_forward.1} parent=0
    _
  %s12 = ssub.s32 1, %s10
  %s13 = scalar_select 0, %s12, %s10
  // Predicated region
  $region2: #{bilstm_forward.1} parent=0 // pred_check
    _
  $region3: #{bilstm_forward.1} parent=0 // pred_check_branch
    %15 = sbr.rel (0) target = $region5
  $region4: #{bilstm_forward.1} parent=0 // pred_region
    _
  $region5: #{bilstm_forward.1} parent=0 // pred_fallthru
    _
  // Predicated region
  $region6: #{bilstm_forward.1} parent=0 // pred_check
    _
  $region7: #{bilstm_forward.1} parent=0 // pred_check_branch
    %17 = sbr.rel (0) target = $region9
  $region8: #{bilstm_forward.1} parent=0 // pred_region
    _
  $region9: #{bilstm_forward.1} parent=0 // pred_fallthru
    _
  // Predicated region
  $region10: #{bilstm_forward.1} parent=0 // pred_check
    _
  $region11: #{bilstm_forward.1} parent=0 // pred_check_branch
    %19 = sbr.rel (0) target = $region13
  $region12: #{bilstm_forward.1} parent=0 // pred_region
    _
  $region13: #{bilstm_forward.1} parent=0 // pred_fallthru
    _
  // Predicated region
  $region14: #{bilstm_forward.1} parent=0 // pred_check
    _
  $region15: #{bilstm_forward.1} parent=0 // pred_check_branch
    %21 = sbr.rel (0) target = $region17
  $region16: #{bilstm_forward.1} parent=0 // pred_region
    _
  $region17: #{bilstm_forward.1} parent=0 // pred_fallthru
    _
  // Predicated region
  $region18: #{bilstm_forward.1} parent=0 // pred_check
    _
  $region19: #{bilstm_forward.1} parent=0 // pred_check_branch
    %23 = sbr.rel (0) target = $region21
  $region20: #{bilstm_forward.1} parent=0 // pred_region
    _
  $region21: #{bilstm_forward.1} parent=0 // pred_fallthru
    _
  // Predicated region
  $region22: #{bilstm_forward.1} parent=0 // pred_check
    _
  $region23: #{bilstm_forward.1} parent=0 // pred_check_branch
    %25 = sbr.rel (0) target = $region25
  $region24: #{bilstm_forward.1} parent=0 // pred_region
    _
  $region25: #{bilstm_forward.1} parent=0 // pred_fallthru
    _
  // Predicated region
  $region26: #{bilstm_forward.1} parent=0 // pred_check
    _
  $region27: #{bilstm_forward.1} parent=0 // pred_check_branch
    %27 = sbr.rel (0) target = $region29
  $region28: #{bilstm_forward.1} parent=0 // pred_region
    _
  $region29: #{bilstm_forward.1} parent=0 // pred_fallthru
    _
  // Predicated region
  $region30: #{bilstm_forward.1} parent=0 // pred_check
    _
  $region31: #{bilstm_forward.1} parent=0 // pred_check_branch
    %29 = sbr.rel (0) target = $region33
  $region32: #{bilstm_forward.1} parent=0 // pred_region
    _
  $region33: #{bilstm_forward.1} parent=0 // pred_fallthru
    _
  // Predicated region
  $region34: #{bilstm_forward.1} parent=0 // pred_check
    _
  $region35: #{bilstm_forward.1} parent=0 // pred_check_branch
    %31 = sbr.rel (0) target = $region37
  $region36: #{bilstm_forward.1} parent=0 // pred_region
    _
  $region37: #{bilstm_forward.1} parent=0 // pred_fallthru
    _
  %v33 = vld [vmem:[%s0] sm:$0xf]
  %v34 = vld [vmem:[%s0 + $0x4] sm:$0xf]
  %v35 = vld [vmem:[%s0 + $0x8] sm:$0xf]
  %v36 = vld [vmem:[%s0 + $0xc] sm:$0xf]
  %v37 = vld [vmem:[%s0 + $0x10] sm:$0xf]
  %v38 = vld [vmem:[%s0 + $0x14] sm:$0xf]
  %v39 = vld [vmem:[%s0 + $0x18] sm:$0xf]
  %v40 = vld [vmem:[%s0 + $0x1c] sm:$0xf]
  %v41 = vld [vmem:[%s1] sm:$0xff]
  %v42 = vld [vmem:[%s1 + $0x8] sm:$0xff]
  %v43 = vld [vmem:[%s1 + $0x10] sm:$0xff]
  %v44 = vld [vmem:[%s1 + $0x18] sm:$0xff]
  %v45 = vld [vmem:[%s1 + $0x20] sm:$0xff]
  %v46 = vld [vmem:[%s1 + $0x28] sm:$0xff]
  %v47 = vld [vmem:[%s1 + $0x30] sm:$0xff]
  %v48 = vld [vmem:[%s1 + $0x38] sm:$0xff]
  %v49 = vld [vmem:[%s2] sm:$0xf]
  %v51 = vlaneseq
  %v52 = vshrl.u32 %v51, 7
  %v53 = vsub.s32 0, %v52
  %v54 = vrot.slane %v49, %v53
  %v55 = vlaneseq
  %v56 = vshrl.u32 %v55, 7
  %v57 = vsub.s32 1, %v56
  %v58 = vrot.slane %v49, %v57
  %v59 = vlaneseq
  %v60 = vshrl.u32 %v59, 7
  %v61 = vsub.s32 2, %v60
  %v62 = vrot.slane %v49, %v61
  %v63 = vlaneseq
  %v64 = vshrl.u32 %v63, 7
  %v65 = vsub.s32 3, %v64
  %v66 = vrot.slane %v49, %v65
  %v79 = vunpack.c.l.b16 %v33
  %v80 = vunpack.c.l.b16 %v34
  %v81 = vunpack.c.l.b16 %v35
  %v82 = vunpack.c.l.b16 %v36
  %v83 = vunpack.c.l.b16 %v37
  %v84 = vunpack.c.l.b16 %v38
  %v85 = vunpack.c.l.b16 %v39
  %v86 = vunpack.c.l.b16 %v40
  %v87 = vpack.c.b16 %v80, %v79
  %v88 = vpack.c.b16 %v82, %v81
  %v89 = vpack.c.b16 %v84, %v83
  %v90 = vpack.c.b16 %v86, %v85
  %v99 = vunpack.c.l.b16 %v41
  %v100 = vunpack.c.h.b16 %v41
  %v101 = vunpack.c.l.b16 %v42
  %v102 = vunpack.c.h.b16 %v42
  %v103 = vunpack.c.l.b16 %v43
  %v104 = vunpack.c.h.b16 %v43
  %v105 = vunpack.c.l.b16 %v44
  %v106 = vunpack.c.h.b16 %v44
  %v107 = vunpack.c.l.b16 %v45
  %v108 = vunpack.c.h.b16 %v45
  %v109 = vunpack.c.l.b16 %v46
  %v110 = vunpack.c.h.b16 %v46
  %v111 = vunpack.c.l.b16 %v47
  %v112 = vunpack.c.h.b16 %v47
  %v113 = vunpack.c.l.b16 %v48
  %v114 = vunpack.c.h.b16 %v48
  %v115 = vpack.c.b16 %v103, %v99
  %v116 = vpack.c.b16 %v104, %v100
  %v117 = vpack.c.b16 %v105, %v101
  %v118 = vpack.c.b16 %v106, %v102
  %v119 = vpack.c.b16 %v111, %v107
  %v120 = vpack.c.b16 %v112, %v108
  %v121 = vpack.c.b16 %v113, %v109
  %v122 = vpack.c.b16 %v114, %v110
  %vm131 = vcmask 261120
  %v133 = vsel %vm131, %v87, 0
  %v136 = vsel %vm131, %v88, 0
  %v139 = vsel %vm131, %v89, 0
  %v142 = vsel %vm131, %v90, 0
  %144 = vmatprep.subr.bf16.mxu0 0
  %145 = vmatpush1.bf16.msra.mxu0 0
  %146 = vmatprep.subr.bf16.mxu0 0
  %147 = vmatpush1.bf16.msra.mxu0 0
  %148 = vmatprep.subr.bf16.mxu0 0
  %149 = vmatpush1.bf16.msra.mxu0 0
  %150 = vmatprep.subr.bf16.mxu0 0
  %151 = vmatpush1.bf16.msra.mxu0 0
  %152 = vmatprep.subr.bf16.mxu0 0
  %153 = vmatpush1.bf16.msra.mxu0 0
  %154 = vmatprep.subr.bf16.mxu0 0
  %155 = vmatpush1.bf16.msra.mxu0 0
  %156 = vmatprep.subr.bf16.mxu0 %v120
  %157 = vmatpush1.bf16.msra.mxu0 %v119
  %158 = vmatprep.subr.bf16.mxu0 %v116
  %159 = vmatpush1.bf16.msra.mxu0 %v115
  %160 = vmatprep.subr.bf16.mxu0 0
  %161 = vmatpush2.bf16.msra.mxu0 0
  %162 = vmatprep.subr.bf16.mxu0 0
  %163 = vmatpush2.bf16.msra.mxu0 0
  %164 = vmatprep.subr.bf16.mxu0 0
  %165 = vmatpush2.bf16.msra.mxu0 0
  %166 = vmatprep.subr.bf16.mxu0 0
  %167 = vmatpush2.bf16.msra.mxu0 0
  %168 = vmatprep.subr.bf16.mxu0 0
  %169 = vmatpush2.bf16.msra.mxu0 0
  %170 = vmatprep.subr.bf16.mxu0 0
  %171 = vmatpush2.bf16.msra.mxu0 0
  %172 = vmatprep.subr.bf16.mxu0 0
  %173 = vmatpush2.bf16.msra.mxu0 0
  %174 = vmatprep.subr.bf16.mxu0 0
  %175 = vmatpush2.bf16.msra.mxu0 0
  %176 = vmatprep.mubr.bf16.mxu0 0
  %177 = vmatmul.mubr.bf16.gmra.mxu0 %v133
  %v178 = vpop.f32.mrf.mxu0
  %v179 = vadd.f32 %v54, %v178
  %v180 = vpop.f32.mrf.mxu0
  %v181 = vadd.f32 %v58, %v180
  %v182 = vpop.f32.mrf.mxu0
  %v183 = vadd.f32 %v54, %v182
  %v184 = vpop.f32.mrf.mxu0
  %v185 = vadd.f32 %v58, %v184
  %186 = vmatprep.mubr.bf16.mxu0 0
  %187 = vmatmul.mubr.bf16.gmra.mxu0 %v136
  %v188 = vpop.f32.mrf.mxu0
  %v189 = vadd.f32 %v54, %v188
  %v190 = vpop.f32.mrf.mxu0
  %v191 = vadd.f32 %v58, %v190
  %v192 = vpop.f32.mrf.mxu0
  %v193 = vadd.f32 %v54, %v192
  %v194 = vpop.f32.mrf.mxu0
  %v195 = vadd.f32 %v58, %v194
  %196 = vmatprep.mubr.bf16.mxu0 0
  %197 = vmatmul.mubr.bf16.gmra.mxu0 %v139
  %v198 = vpop.f32.mrf.mxu0
  %v199 = vadd.f32 %v54, %v198
  %v200 = vpop.f32.mrf.mxu0
  %v201 = vadd.f32 %v58, %v200
  %v202 = vpop.f32.mrf.mxu0
  %v203 = vadd.f32 %v54, %v202
  %v204 = vpop.f32.mrf.mxu0
  %v205 = vadd.f32 %v58, %v204
  %206 = vmatprep.mubr.bf16.mxu0 0
  %207 = vmatmul.mubr.bf16.gmra.mxu0 %v142
  %v208 = vpop.f32.mrf.mxu0
  %v209 = vadd.f32 %v54, %v208
  %v210 = vpop.f32.mrf.mxu0
  %v211 = vadd.f32 %v58, %v210
  %v212 = vpop.f32.mrf.mxu0
  %v213 = vadd.f32 %v54, %v212
  %v214 = vpop.f32.mrf.mxu0
  %v215 = vadd.f32 %v58, %v214
  %216 = vdwg.mxu0
  %217 = vmatprep.subr.bf16.mxu0 0
  %218 = vmatpush1.bf16.msra.mxu0 0
  %219 = vmatprep.subr.bf16.mxu0 0
  %220 = vmatpush1.bf16.msra.mxu0 0
  %221 = vmatprep.subr.bf16.mxu0 0
  %222 = vmatpush1.bf16.msra.mxu0 0
  %223 = vmatprep.subr.bf16.mxu0 0
  %224 = vmatpush1.bf16.msra.mxu0 0
  %225 = vmatprep.subr.bf16.mxu0 0
  %226 = vmatpush1.bf16.msra.mxu0 0
  %227 = vmatprep.subr.bf16.mxu0 0
  %228 = vmatpush1.bf16.msra.mxu0 0
  %229 = vmatprep.subr.bf16.mxu0 %v122
  %230 = vmatpush1.bf16.msra.mxu0 %v121
  %231 = vmatprep.subr.bf16.mxu0 %v118
  %232 = vmatpush1.bf16.msra.mxu0 %v117
  %233 = vmatprep.subr.bf16.mxu0 0
  %234 = vmatpush2.bf16.msra.mxu0 0
  %235 = vmatprep.subr.bf16.mxu0 0
  %236 = vmatpush2.bf16.msra.mxu0 0
  %237 = vmatprep.subr.bf16.mxu0 0
  %238 = vmatpush2.bf16.msra.mxu0 0
  %239 = vmatprep.subr.bf16.mxu0 0
  %240 = vmatpush2.bf16.msra.mxu0 0
  %241 = vmatprep.subr.bf16.mxu0 0
  %242 = vmatpush2.bf16.msra.mxu0 0
  %243 = vmatprep.subr.bf16.mxu0 0
  %244 = vmatpush2.bf16.msra.mxu0 0
  %245 = vmatprep.subr.bf16.mxu0 0
  %246 = vmatpush2.bf16.msra.mxu0 0
  %247 = vmatprep.subr.bf16.mxu0 0
  %248 = vmatpush2.bf16.msra.mxu0 0
  %249 = vmatprep.mubr.bf16.mxu0 0
  %250 = vmatmul.mubr.bf16.gmra.mxu0 %v133
  %v251 = vpop.f32.mrf.mxu0
  %v252 = vadd.f32 %v62, %v251
  %v253 = vpop.f32.mrf.mxu0
  %v254 = vadd.f32 %v66, %v253
  %v255 = vpop.f32.mrf.mxu0
  %v256 = vadd.f32 %v62, %v255
  %v257 = vpop.f32.mrf.mxu0
  %v258 = vadd.f32 %v66, %v257
  %259 = vmatprep.mubr.bf16.mxu0 0
  %260 = vmatmul.mubr.bf16.gmra.mxu0 %v136
  %v261 = vpop.f32.mrf.mxu0
  %v262 = vadd.f32 %v62, %v261
  %v263 = vpop.f32.mrf.mxu0
  %v264 = vadd.f32 %v66, %v263
  %v265 = vpop.f32.mrf.mxu0
  %v266 = vadd.f32 %v62, %v265
  %v267 = vpop.f32.mrf.mxu0
  %v268 = vadd.f32 %v66, %v267
  %269 = vmatprep.mubr.bf16.mxu0 0
  %270 = vmatmul.mubr.bf16.gmra.mxu0 %v139
  %v271 = vpop.f32.mrf.mxu0
  %v272 = vadd.f32 %v62, %v271
  %v273 = vpop.f32.mrf.mxu0
  %v274 = vadd.f32 %v66, %v273
  %v275 = vpop.f32.mrf.mxu0
  %v276 = vadd.f32 %v62, %v275
  %v277 = vpop.f32.mrf.mxu0
  %v278 = vadd.f32 %v66, %v277
  %279 = vmatprep.mubr.bf16.mxu0 0
  %280 = vmatmul.mubr.bf16.gmra.mxu0 %v142
  %v281 = vpop.f32.mrf.mxu0
  %v282 = vadd.f32 %v62, %v281
  %v283 = vpop.f32.mrf.mxu0
  %v284 = vadd.f32 %v66, %v283
  %v285 = vpop.f32.mrf.mxu0
  %v286 = vadd.f32 %v62, %v285
  %v287 = vpop.f32.mrf.mxu0
  %v288 = vadd.f32 %v66, %v287
  %289 = vdwg.mxu0
  %v290 = vpack.c.bf16 %v183, %v179
  %v291 = vpack.c.bf16 %v185, %v181
  %v292 = vpack.c.bf16 %v256, %v252
  %v293 = vpack.c.bf16 %v258, %v254
  %v294 = vpack.c.bf16 %v193, %v189
  %v295 = vpack.c.bf16 %v195, %v191
  %v296 = vpack.c.bf16 %v266, %v262
  %v297 = vpack.c.bf16 %v268, %v264
  %v298 = vpack.c.bf16 %v203, %v199
  %v299 = vpack.c.bf16 %v205, %v201
  %v300 = vpack.c.bf16 %v276, %v272
  %v301 = vpack.c.bf16 %v278, %v274
  %v302 = vpack.c.bf16 %v213, %v209
  %v303 = vpack.c.bf16 %v215, %v211
  %v304 = vpack.c.bf16 %v286, %v282
  %v305 = vpack.c.bf16 %v288, %v284
  %v322 = vunpack.c.l.b16 %v290
  %v323 = vunpack.c.l.b16 %v291
  %v324 = vunpack.c.l.b16 %v292
  %v325 = vunpack.c.l.b16 %v293
  %v326 = vunpack.c.h.b16 %v290
  %v327 = vunpack.c.h.b16 %v291
  %v328 = vunpack.c.h.b16 %v292
  %v329 = vunpack.c.h.b16 %v293
  %v330 = vunpack.c.l.b16 %v294
  %v331 = vunpack.c.l.b16 %v295
  %v332 = vunpack.c.l.b16 %v296
  %v333 = vunpack.c.l.b16 %v297
  %v334 = vunpack.c.h.b16 %v294
  %v335 = vunpack.c.h.b16 %v295
  %v336 = vunpack.c.h.b16 %v296
  %v337 = vunpack.c.h.b16 %v297
  %v338 = vunpack.c.l.b16 %v298
  %v339 = vunpack.c.l.b16 %v299
  %v340 = vunpack.c.l.b16 %v300
  %v341 = vunpack.c.l.b16 %v301
  %v342 = vunpack.c.h.b16 %v298
  %v343 = vunpack.c.h.b16 %v299
  %v344 = vunpack.c.h.b16 %v300
  %v345 = vunpack.c.h.b16 %v301
  %v346 = vunpack.c.l.b16 %v302
  %v347 = vunpack.c.l.b16 %v303
  %v348 = vunpack.c.l.b16 %v304
  %v349 = vunpack.c.l.b16 %v305
  %v350 = vunpack.c.h.b16 %v302
  %v351 = vunpack.c.h.b16 %v303
  %v352 = vunpack.c.h.b16 %v304
  %v353 = vunpack.c.h.b16 %v305
  %v354 = vpack.c.b16 %v323, %v322
  %v355 = vpack.c.b16 %v325, %v324
  %v356 = vpack.c.b16 %v327, %v326
  %v357 = vpack.c.b16 %v329, %v328
  %v358 = vpack.c.b16 %v331, %v330
  %v359 = vpack.c.b16 %v333, %v332
  %v360 = vpack.c.b16 %v335, %v334
  %v361 = vpack.c.b16 %v337, %v336
  %v362 = vpack.c.b16 %v339, %v338
  %v363 = vpack.c.b16 %v341, %v340
  %v364 = vpack.c.b16 %v343, %v342
  %v365 = vpack.c.b16 %v345, %v344
  %v366 = vpack.c.b16 %v347, %v346
  %v367 = vpack.c.b16 %v349, %v348
  %v368 = vpack.c.b16 %v351, %v350
  %v369 = vpack.c.b16 %v353, %v352
  %386 = vst [vmem:[#allocation2] sm:$0xff] %v354
  %387 = vst [vmem:[#allocation2 + $0x8] sm:$0xff] %v355
  %388 = vst [vmem:[#allocation2 + $0x10] sm:$0xff] %v356
  %389 = vst [vmem:[#allocation2 + $0x18] sm:$0xff] %v357
  %390 = vst [vmem:[#allocation2 + $0x20] sm:$0xff] %v358
  %391 = vst [vmem:[#allocation2 + $0x28] sm:$0xff] %v359
  %392 = vst [vmem:[#allocation2 + $0x30] sm:$0xff] %v360
  %393 = vst [vmem:[#allocation2 + $0x38] sm:$0xff] %v361
  %394 = vst [vmem:[#allocation2 + $0x40] sm:$0xff] %v362
  %395 = vst [vmem:[#allocation2 + $0x48] sm:$0xff] %v363
  %396 = vst [vmem:[#allocation2 + $0x50] sm:$0xff] %v364
  %397 = vst [vmem:[#allocation2 + $0x58] sm:$0xff] %v365
  %398 = vst [vmem:[#allocation2 + $0x60] sm:$0xff] %v366
  %399 = vst [vmem:[#allocation2 + $0x68] sm:$0xff] %v367
  %400 = vst [vmem:[#allocation2 + $0x70] sm:$0xff] %v368
  %401 = vst [vmem:[#allocation2 + $0x78] sm:$0xff] %v369
  %v402 = vlaneseq
  %v403 = vand.u32 %v402, 127
  %v404 = vadd.s32 %v403, 128
  %v405 = vadd.s32 %v403, 256
  %v406 = vadd.s32 %v403, 384
  %v407 = vand.u32 %v403, 127
  %v408 = vand.u32 %v404, 127
  %v409 = vand.u32 %v405, 127
  %v410 = vand.u32 %v406, 127
  %vm411 = vcmp.lt.s32.totalorder %v407, 64
  %vm412 = vcmp.lt.s32.totalorder %v408, 64
  %vm413 = vcmp.lt.s32.totalorder %v409, 64
  %vm414 = vcmp.lt.s32.totalorder %v410, 64
  %v415 = vld [vmem:[%s3] sm:$0xff]
  %v416 = vld [vmem:[%s3 + $0x8] sm:$0xff]
  %v417 = vld [vmem:[%s3 + $0x10] sm:$0xff]
  %v418 = vld [vmem:[%s3 + $0x18] sm:$0xff]
  %v419 = vld [vmem:[%s3 + $0x20] sm:$0xff]
  %v420 = vld [vmem:[%s3 + $0x28] sm:$0xff]
  %v421 = vld [vmem:[%s3 + $0x30] sm:$0xff]
  %v422 = vld [vmem:[%s3 + $0x38] sm:$0xff]
  %v423 = vld [vmem:[%s3 + $0x40] sm:$0xff]
  %v424 = vld [vmem:[%s3 + $0x48] sm:$0xff]
  %v425 = vld [vmem:[%s3 + $0x50] sm:$0xff]
  %v426 = vld [vmem:[%s3 + $0x58] sm:$0xff]
  %v427 = vld [vmem:[%s3 + $0x60] sm:$0xff]
  %v428 = vld [vmem:[%s3 + $0x68] sm:$0xff]
  %v429 = vld [vmem:[%s3 + $0x70] sm:$0xff]
  %v430 = vld [vmem:[%s3 + $0x78] sm:$0xff]
  %v431 = vld [vmem:[%s3 + $0x80] sm:$0xff]
  %v432 = vld [vmem:[%s3 + $0x88] sm:$0xff]
  %v433 = vld [vmem:[%s3 + $0x90] sm:$0xff]
  %v434 = vld [vmem:[%s3 + $0x98] sm:$0xff]
  %v435 = vld [vmem:[%s3 + $0xa0] sm:$0xff]
  %v436 = vld [vmem:[%s3 + $0xa8] sm:$0xff]
  %v437 = vld [vmem:[%s3 + $0xb0] sm:$0xff]
  %v438 = vld [vmem:[%s3 + $0xb8] sm:$0xff]
  %v439 = vld [vmem:[%s3 + $0xc0] sm:$0xff]
  %v440 = vld [vmem:[%s3 + $0xc8] sm:$0xff]
  %v441 = vld [vmem:[%s3 + $0xd0] sm:$0xff]
  %v442 = vld [vmem:[%s3 + $0xd8] sm:$0xff]
  %v443 = vld [vmem:[%s3 + $0xe0] sm:$0xff]
  %v444 = vld [vmem:[%s3 + $0xe8] sm:$0xff]
  %v445 = vld [vmem:[%s3 + $0xf0] sm:$0xff]
  %v446 = vld [vmem:[%s3 + $0xf8] sm:$0xff]
  %v479 = vunpack.c.l.b16 %v415
  %v480 = vunpack.c.h.b16 %v415
  %v481 = vunpack.c.l.b16 %v416
  %v482 = vunpack.c.h.b16 %v416
  %v483 = vunpack.c.l.b16 %v417
  %v484 = vunpack.c.h.b16 %v417
  %v485 = vunpack.c.l.b16 %v418
  %v486 = vunpack.c.h.b16 %v418
  %v487 = vunpack.c.l.b16 %v419
  %v488 = vunpack.c.h.b16 %v419
  %v489 = vunpack.c.l.b16 %v420
  %v490 = vunpack.c.h.b16 %v420
  %v491 = vunpack.c.l.b16 %v421
  %v492 = vunpack.c.h.b16 %v421
  %v493 = vunpack.c.l.b16 %v422
  %v494 = vunpack.c.h.b16 %v422
  %v495 = vunpack.c.l.b16 %v423
  %v496 = vunpack.c.h.b16 %v423
  %v497 = vunpack.c.l.b16 %v424
  %v498 = vunpack.c.h.b16 %v424
  %v499 = vunpack.c.l.b16 %v425
  %v500 = vunpack.c.h.b16 %v425
  %v501 = vunpack.c.l.b16 %v426
  %v502 = vunpack.c.h.b16 %v426
  %v503 = vunpack.c.l.b16 %v427
  %v504 = vunpack.c.h.b16 %v427
  %v505 = vunpack.c.l.b16 %v428
  %v506 = vunpack.c.h.b16 %v428
  %v507 = vunpack.c.l.b16 %v429
  %v508 = vunpack.c.h.b16 %v429
  %v509 = vunpack.c.l.b16 %v430
  %v510 = vunpack.c.h.b16 %v430
  %v511 = vunpack.c.l.b16 %v431
  %v512 = vunpack.c.h.b16 %v431
  %v513 = vunpack.c.l.b16 %v432
  %v514 = vunpack.c.h.b16 %v432
  %v515 = vunpack.c.l.b16 %v433
  %v516 = vunpack.c.h.b16 %v433
  %v517 = vunpack.c.l.b16 %v434
  %v518 = vunpack.c.h.b16 %v434
  %v519 = vunpack.c.l.b16 %v435
  %v520 = vunpack.c.h.b16 %v435
  %v521 = vunpack.c.l.b16 %v436
  %v522 = vunpack.c.h.b16 %v436
  %v523 = vunpack.c.l.b16 %v437
  %v524 = vunpack.c.h.b16 %v437
  %v525 = vunpack.c.l.b16 %v438
  %v526 = vunpack.c.h.b16 %v438
  %v527 = vunpack.c.l.b16 %v439
  %v528 = vunpack.c.h.b16 %v439
  %v529 = vunpack.c.l.b16 %v440
  %v530 = vunpack.c.h.b16 %v440
  %v531 = vunpack.c.l.b16 %v441
  %v532 = vunpack.c.h.b16 %v441
  %v533 = vunpack.c.l.b16 %v442
  %v534 = vunpack.c.h.b16 %v442
  %v535 = vunpack.c.l.b16 %v443
  %v536 = vunpack.c.h.b16 %v443
  %v537 = vunpack.c.l.b16 %v444
  %v538 = vunpack.c.h.b16 %v444
  %v539 = vunpack.c.l.b16 %v445
  %v540 = vunpack.c.h.b16 %v445
  %v541 = vunpack.c.l.b16 %v446
  %v542 = vunpack.c.h.b16 %v446
  %v543 = vpack.c.b16 %v483, %v479
  %v544 = vpack.c.b16 %v484, %v480
  %v545 = vpack.c.b16 %v485, %v481
  %v546 = vpack.c.b16 %v486, %v482
  %v547 = vpack.c.b16 %v491, %v487
  %v548 = vpack.c.b16 %v492, %v488
  %v549 = vpack.c.b16 %v493, %v489
  %v550 = vpack.c.b16 %v494, %v490
  %v551 = vpack.c.b16 %v499, %v495
  %v552 = vpack.c.b16 %v500, %v496
  %v553 = vpack.c.b16 %v501, %v497
  %v554 = vpack.c.b16 %v502, %v498
  %v555 = vpack.c.b16 %v507, %v503
  %v556 = vpack.c.b16 %v508, %v504
  %v557 = vpack.c.b16 %v509, %v505
  %v558 = vpack.c.b16 %v510, %v506
  %v559 = vpack.c.b16 %v515, %v511
  %v560 = vpack.c.b16 %v516, %v512
  %v561 = vpack.c.b16 %v517, %v513
  %v562 = vpack.c.b16 %v518, %v514
  %v563 = vpack.c.b16 %v523, %v519
  %v564 = vpack.c.b16 %v524, %v520
  %v565 = vpack.c.b16 %v525, %v521
  %v566 = vpack.c.b16 %v526, %v522
  %v567 = vpack.c.b16 %v531, %v527
  %v568 = vpack.c.b16 %v532, %v528
  %v569 = vpack.c.b16 %v533, %v529
  %v570 = vpack.c.b16 %v534, %v530
  %v571 = vpack.c.b16 %v539, %v535
  %v572 = vpack.c.b16 %v540, %v536
  %v573 = vpack.c.b16 %v541, %v537
  %v574 = vpack.c.b16 %v542, %v538
  %607 = vmatprep.subr.bf16.mxu0 %v572
  %608 = vmatpush1.bf16.msra.mxu0 %v571
  %609 = vmatprep.subr.bf16.mxu0 %v568
  %610 = vmatpush1.bf16.msra.mxu0 %v567
  %611 = vmatprep.subr.bf16.mxu0 %v564
  %612 = vmatpush1.bf16.msra.mxu0 %v563
  %613 = vmatprep.subr.bf16.mxu0 %v560
  %614 = vmatpush1.bf16.msra.mxu0 %v559
  %615 = vmatprep.subr.bf16.mxu0 %v556
  %616 = vmatpush1.bf16.msra.mxu0 %v555
  %617 = vmatprep.subr.bf16.mxu0 %v552
  %618 = vmatpush1.bf16.msra.mxu0 %v551
  %619 = vmatprep.subr.bf16.mxu0 %v548
  %620 = vmatpush1.bf16.msra.mxu0 %v547
  %621 = vmatprep.subr.bf16.mxu0 %v544
  %622 = vmatpush1.bf16.msra.mxu0 %v543
  %623 = vmatprep.subr.bf16.mxu0 0
  %624 = vmatpush2.bf16.msra.mxu0 0
  %625 = vmatprep.subr.bf16.mxu0 0
  %626 = vmatpush2.bf16.msra.mxu0 0
  %627 = vmatprep.subr.bf16.mxu0 0
  %628 = vmatpush2.bf16.msra.mxu0 0
  %629 = vmatprep.subr.bf16.mxu0 0
  %630 = vmatpush2.bf16.msra.mxu0 0
  %631 = vmatprep.subr.bf16.mxu0 0
  %632 = vmatpush2.bf16.msra.mxu0 0
  %633 = vmatprep.subr.bf16.mxu0 0
  %634 = vmatpush2.bf16.msra.mxu0 0
  %635 = vmatprep.subr.bf16.mxu0 0
  %636 = vmatpush2.bf16.msra.mxu0 0
  %637 = vmatprep.subr.bf16.mxu0 0
  %638 = vmatpush2.bf16.msra.mxu0 0
  %639 = vmatprep.mubr.bf16.mxu0 0
  %640 = vmatmul.mubr.bf16.gmra.mxu0 0
  %v641 = vpop.f32.mrf.mxu0
  %v642 = vadd.f32 0.0, %v641
  %v643 = vpop.f32.mrf.mxu0
  %v644 = vadd.f32 0.0, %v643
  %v645 = vpop.f32.mrf.mxu0
  %v646 = vpop.f32.mrf.mxu0
  %647 = vdwg.mxu0
  %648 = vmatprep.subr.bf16.mxu0 %v574
  %649 = vmatpush1.bf16.msra.mxu0 %v573
  %650 = vmatprep.subr.bf16.mxu0 %v570
  %651 = vmatpush1.bf16.msra.mxu0 %v569
  %652 = vmatprep.subr.bf16.mxu0 %v566
  %653 = vmatpush1.bf16.msra.mxu0 %v565
  %654 = vmatprep.subr.bf16.mxu0 %v562
  %655 = vmatpush1.bf16.msra.mxu0 %v561
  %656 = vmatprep.subr.bf16.mxu0 %v558
  %657 = vmatpush1.bf16.msra.mxu0 %v557
  %658 = vmatprep.subr.bf16.mxu0 %v554
  %659 = vmatpush1.bf16.msra.mxu0 %v553
  %660 = vmatprep.subr.bf16.mxu0 %v550
  %661 = vmatpush1.bf16.msra.mxu0 %v549
  %662 = vmatprep.subr.bf16.mxu0 %v546
  %663 = vmatpush1.bf16.msra.mxu0 %v545
  %664 = vmatprep.subr.bf16.mxu0 0
  %665 = vmatpush2.bf16.msra.mxu0 0
  %666 = vmatprep.subr.bf16.mxu0 0
  %667 = vmatpush2.bf16.msra.mxu0 0
  %668 = vmatprep.subr.bf16.mxu0 0
  %669 = vmatpush2.bf16.msra.mxu0 0
  %670 = vmatprep.subr.bf16.mxu0 0
  %671 = vmatpush2.bf16.msra.mxu0 0
  %672 = vmatprep.subr.bf16.mxu0 0
  %673 = vmatpush2.bf16.msra.mxu0 0
  %674 = vmatprep.subr.bf16.mxu0 0
  %675 = vmatpush2.bf16.msra.mxu0 0
  %676 = vmatprep.subr.bf16.mxu0 0
  %677 = vmatpush2.bf16.msra.mxu0 0
  %678 = vmatprep.subr.bf16.mxu0 0
  %679 = vmatpush2.bf16.msra.mxu0 0
  %680 = vmatprep.mubr.bf16.mxu0 0
  %681 = vmatmul.mubr.bf16.gmra.mxu0 0
  %v682 = vpop.f32.mrf.mxu0
  %v683 = vadd.f32 0.0, %v682
  %v684 = vpop.f32.mrf.mxu0
  %v685 = vadd.f32 0.0, %v684
  %v686 = vpop.f32.mrf.mxu0
  %v687 = vpop.f32.mrf.mxu0
  %688 = vdwg.mxu0
  %v689 = vld [vmem:[#allocation2] sm:$0xff]
  %v690 = vld [vmem:[#allocation2 + $0x8] sm:$0xff]
  %v691 = vunpack.c.l.bf16 %v689
  %v692 = vunpack.c.h.bf16 %v689
  %v693 = vunpack.c.l.bf16 %v690
  %v694 = vunpack.c.h.bf16 %v690
  %s695 = scalar_lea.vmem [#allocation2], 112
  %v696 = vld [vmem:[%s695] sm:$0xff]
  %v697 = vld [vmem:[%s695 + $0x8] sm:$0xff]
  %v698 = vunpack.c.l.bf16 %v696
  %v699 = vunpack.c.h.bf16 %v696
  %v700 = vunpack.c.l.bf16 %v697
  %v701 = vunpack.c.h.bf16 %v697
  %v702 = vsel %vm411, %v691, %v698
  %v703 = vsel %vm412, %v692, %v699
  %v704 = vsel %vm413, %v693, %v700
  %v705 = vsel %vm414, %v694, %v701
  %v706 = vadd.f32 %v702, %v642
  %v707 = vadd.f32 %v703, %v644
  %v708 = vadd.f32 %v704, %v683
  %v709 = vadd.f32 %v705, %v685
  %v710 = vxor.u32 %v706, 2147483648
  %v711 = vxor.u32 %v707, 2147483648
  %v712 = vmul.f32 %v710, 1.442695
  %v713 = vpow.pop %v712
  %v714 = vmul.f32 %v711, 1.442695
  %v715 = vpow.pop %v714
  %v716 = vadd.f32 %v713, 1.0
  %v717 = vadd.f32 %v715, 1.0
  %v718 = vrcp.pop %v716
  %v719 = vmul.f32 1.0, %v718
  %v720 = vrcp.pop %v717
  %v721 = vmul.f32 1.0, %v720
  %v722 = vxor.u32 %v709, 2147483648
  %v723 = vmul.f32 %v722, 1.442695
  %v724 = vpow.pop %v723
  %v725 = vadd.f32 %v724, 1.0
  %v726 = vrcp.pop %v725
  %v727 = vmul.f32 1.0, %v726
  %v728 = vtanh.pop %v708
  %v729 = vmul.f32 %v721, 0.0
  %v730 = vmul.f32 %v719, %v728
  %v731 = vadd.f32 %v729, %v730
  %v732 = vtanh.pop %v731
  %v733 = vmul.f32 %v727, %v732
  %v734 = vadd.f32 %v733, 0.0
  %v735 = vpack.c.bf16 %v733, %v733
  %736 = vmatprep.subr.bf16.mxu0 %v572
  %737 = vmatpush1.bf16.msra.mxu0 %v571
  %738 = vmatprep.subr.bf16.mxu0 %v568
  %739 = vmatpush1.bf16.msra.mxu0 %v567
  %740 = vmatprep.subr.bf16.mxu0 %v564
  %741 = vmatpush1.bf16.msra.mxu0 %v563
  %742 = vmatprep.subr.bf16.mxu0 %v560
  %743 = vmatpush1.bf16.msra.mxu0 %v559
  %744 = vmatprep.subr.bf16.mxu0 %v556
  %745 = vmatpush1.bf16.msra.mxu0 %v555
  %746 = vmatprep.subr.bf16.mxu0 %v552
  %747 = vmatpush1.bf16.msra.mxu0 %v551
  %748 = vmatprep.subr.bf16.mxu0 %v548
  %749 = vmatpush1.bf16.msra.mxu0 %v547
  %750 = vmatprep.subr.bf16.mxu0 %v544
  %751 = vmatpush1.bf16.msra.mxu0 %v543
  %752 = vmatprep.subr.bf16.mxu0 0
  %753 = vmatpush2.bf16.msra.mxu0 0
  %754 = vmatprep.subr.bf16.mxu0 0
  %755 = vmatpush2.bf16.msra.mxu0 0
  %756 = vmatprep.subr.bf16.mxu0 0
  %757 = vmatpush2.bf16.msra.mxu0 0
  %758 = vmatprep.subr.bf16.mxu0 0
  %759 = vmatpush2.bf16.msra.mxu0 0
  %760 = vmatprep.subr.bf16.mxu0 0
  %761 = vmatpush2.bf16.msra.mxu0 0
  %762 = vmatprep.subr.bf16.mxu0 0
  %763 = vmatpush2.bf16.msra.mxu0 0
  %764 = vmatprep.subr.bf16.mxu0 0
  %765 = vmatpush2.bf16.msra.mxu0 0
  %766 = vmatprep.subr.bf16.mxu0 0
  %767 = vmatpush2.bf16.msra.mxu0 0
  %768 = vmatprep.mubr.bf16.mxu0 0
  %769 = vmatmul.mubr.bf16.gmra.mxu0 %v735
  %v770 = vpop.f32.mrf.mxu0
  %v771 = vadd.f32 0.0, %v770
  %v772 = vpop.f32.mrf.mxu0
  %v773 = vadd.f32 0.0, %v772
  %v774 = vpop.f32.mrf.mxu0
  %v775 = vpop.f32.mrf.mxu0
  %776 = vdwg.mxu0
  %777 = vmatprep.subr.bf16.mxu0 %v574
  %778 = vmatpush1.bf16.msra.mxu0 %v573
  %779 = vmatprep.subr.bf16.mxu0 %v570
  %780 = vmatpush1.bf16.msra.mxu0 %v569
  %781 = vmatprep.subr.bf16.mxu0 %v566
  %782 = vmatpush1.bf16.msra.mxu0 %v565
  %783 = vmatprep.subr.bf16.mxu0 %v562
  %784 = vmatpush1.bf16.msra.mxu0 %v561
  %785 = vmatprep.subr.bf16.mxu0 %v558
  %786 = vmatpush1.bf16.msra.mxu0 %v557
  %787 = vmatprep.subr.bf16.mxu0 %v554
  %788 = vmatpush1.bf16.msra.mxu0 %v553
  %789 = vmatprep.subr.bf16.mxu0 %v550
  %790 = vmatpush1.bf16.msra.mxu0 %v549
  %791 = vmatprep.subr.bf16.mxu0 %v546
  %792 = vmatpush1.bf16.msra.mxu0 %v545
  %793 = vmatprep.subr.bf16.mxu0 0
  %794 = vmatpush2.bf16.msra.mxu0 0
  %795 = vmatprep.subr.bf16.mxu0 0
  %796 = vmatpush2.bf16.msra.mxu0 0
  %797 = vmatprep.subr.bf16.mxu0 0
  %798 = vmatpush2.bf16.msra.mxu0 0
  %799 = vmatprep.subr.bf16.mxu0 0
  %800 = vmatpush2.bf16.msra.mxu0 0
  %801 = vmatprep.subr.bf16.mxu0 0
  %802 = vmatpush2.bf16.msra.mxu0 0
  %803 = vmatprep.subr.bf16.mxu0 0
  %804 = vmatpush2.bf16.msra.mxu0 0
  %805 = vmatprep.subr.bf16.mxu0 0
  %806 = vmatpush2.bf16.msra.mxu0 0
  %807 = vmatprep.subr.bf16.mxu0 0
  %808 = vmatpush2.bf16.msra.mxu0 0
  %809 = vmatprep.mubr.bf16.mxu0 0
  %810 = vmatmul.mubr.bf16.gmra.mxu0 %v735
  %v811 = vpop.f32.mrf.mxu0
  %v812 = vadd.f32 0.0, %v811
  %v813 = vpop.f32.mrf.mxu0
  %v814 = vadd.f32 0.0, %v813
  %v815 = vpop.f32.mrf.mxu0
  %v816 = vpop.f32.mrf.mxu0
  %817 = vdwg.mxu0
  %s818 = scalar_lea.vmem [#allocation2], 16
  %v819 = vld [vmem:[%s818] sm:$0xff]
  %v820 = vld [vmem:[%s818 + $0x8] sm:$0xff]
  %v821 = vunpack.c.l.bf16 %v819
  %v822 = vunpack.c.h.bf16 %v819
  %v823 = vunpack.c.l.bf16 %v820
  %v824 = vunpack.c.h.bf16 %v820
  %s825 = scalar_lea.vmem [#allocation2], 96
  %v826 = vld [vmem:[%s825] sm:$0xff]
  %v827 = vld [vmem:[%s825 + $0x8] sm:$0xff]
  %v828 = vunpack.c.l.bf16 %v826
  %v829 = vunpack.c.h.bf16 %v826
  %v830 = vunpack.c.l.bf16 %v827
  %v831 = vunpack.c.h.bf16 %v827
  %v832 = vsel %vm411, %v821, %v828
  %v833 = vsel %vm412, %v822, %v829
  %v834 = vsel %vm413, %v823, %v830
  %v835 = vsel %vm414, %v824, %v831
  %v836 = vadd.f32 %v832, %v771
  %v837 = vadd.f32 %v833, %v773
  %v838 = vadd.f32 %v834, %v812
  %v839 = vadd.f32 %v835, %v814
  %v840 = vxor.u32 %v836, 2147483648
  %v841 = vxor.u32 %v837, 2147483648
  %v842 = vmul.f32 %v840, 1.442695
  %v843 = vpow.pop %v842
  %v844 = vmul.f32 %v841, 1.442695
  %v845 = vpow.pop %v844
  %v846 = vadd.f32 %v843, 1.0
  %v847 = vadd.f32 %v845, 1.0
  %v848 = vrcp.pop %v846
  %v849 = vmul.f32 1.0, %v848
  %v850 = vrcp.pop %v847
  %v851 = vmul.f32 1.0, %v850
  %v852 = vxor.u32 %v839, 2147483648
  %v853 = vmul.f32 %v852, 1.442695
  %v854 = vpow.pop %v853
  %v855 = vadd.f32 %v854, 1.0
  %v856 = vrcp.pop %v855
  %v857 = vmul.f32 1.0, %v856
  %v858 = vtanh.pop %v838
  %v859 = vmul.f32 %v851, %v731
  %v860 = vmul.f32 %v849, %v858
  %v861 = vadd.f32 %v859, %v860
  %v862 = vtanh.pop %v861
  %v863 = vmul.f32 %v857, %v862
  %v864 = vadd.f32 %v734, %v863
  %v865 = vmax.f32 %v733, %v863
  %v866 = vpack.c.bf16 %v863, %v863
  %867 = vmatprep.subr.bf16.mxu0 %v572
  %868 = vmatpush1.bf16.msra.mxu0 %v571
  %869 = vmatprep.subr.bf16.mxu0 %v568
  %870 = vmatpush1.bf16.msra.mxu0 %v567
  %871 = vmatprep.subr.bf16.mxu0 %v564
  %872 = vmatpush1.bf16.msra.mxu0 %v563
  %873 = vmatprep.subr.bf16.mxu0 %v560
  %874 = vmatpush1.bf16.msra.mxu0 %v559
  %875 = vmatprep.subr.bf16.mxu0 %v556
  %876 = vmatpush1.bf16.msra.mxu0 %v555
  %877 = vmatprep.subr.bf16.mxu0 %v552
  %878 = vmatpush1.bf16.msra.mxu0 %v551
  %879 = vmatprep.subr.bf16.mxu0 %v548
  %880 = vmatpush1.bf16.msra.mxu0 %v547
  %881 = vmatprep.subr.bf16.mxu0 %v544
  %882 = vmatpush1.bf16.msra.mxu0 %v543
  %883 = vmatprep.subr.bf16.mxu0 0
  %884 = vmatpush2.bf16.msra.mxu0 0
  %885 = vmatprep.subr.bf16.mxu0 0
  %886 = vmatpush2.bf16.msra.mxu0 0
  %887 = vmatprep.subr.bf16.mxu0 0
  %888 = vmatpush2.bf16.msra.mxu0 0
  %889 = vmatprep.subr.bf16.mxu0 0
  %890 = vmatpush2.bf16.msra.mxu0 0
  %891 = vmatprep.subr.bf16.mxu0 0
  %892 = vmatpush2.bf16.msra.mxu0 0
  %893 = vmatprep.subr.bf16.mxu0 0
  %894 = vmatpush2.bf16.msra.mxu0 0
  %895 = vmatprep.subr.bf16.mxu0 0
  %896 = vmatpush2.bf16.msra.mxu0 0
  %897 = vmatprep.subr.bf16.mxu0 0
  %898 = vmatpush2.bf16.msra.mxu0 0
  %899 = vmatprep.mubr.bf16.mxu0 0
  %900 = vmatmul.mubr.bf16.gmra.mxu0 %v866
  %v901 = vpop.f32.mrf.mxu0
  %v902 = vadd.f32 0.0, %v901
  %v903 = vpop.f32.mrf.mxu0
  %v904 = vadd.f32 0.0, %v903
  %v905 = vpop.f32.mrf.mxu0
  %v906 = vpop.f32.mrf.mxu0
  %907 = vdwg.mxu0
  %908 = vmatprep.subr.bf16.mxu0 %v574
  %909 = vmatpush1.bf16.msra.mxu0 %v573
  %910 = vmatprep.subr.bf16.mxu0 %v570
  %911 = vmatpush1.bf16.msra.mxu0 %v569
  %912 = vmatprep.subr.bf16.mxu0 %v566
  %913 = vmatpush1.bf16.msra.mxu0 %v565
  %914 = vmatprep.subr.bf16.mxu0 %v562
  %915 = vmatpush1.bf16.msra.mxu0 %v561
  %916 = vmatprep.subr.bf16.mxu0 %v558
  %917 = vmatpush1.bf16.msra.mxu0 %v557
  %918 = vmatprep.subr.bf16.mxu0 %v554
  %919 = vmatpush1.bf16.msra.mxu0 %v553
  %920 = vmatprep.subr.bf16.mxu0 %v550
  %921 = vmatpush1.bf16.msra.mxu0 %v549
  %922 = vmatprep.subr.bf16.mxu0 %v546
  %923 = vmatpush1.bf16.msra.mxu0 %v545
  %924 = vmatprep.subr.bf16.mxu0 0
  %925 = vmatpush2.bf16.msra.mxu0 0
  %926 = vmatprep.subr.bf16.mxu0 0
  %927 = vmatpush2.bf16.msra.mxu0 0
  %928 = vmatprep.subr.bf16.mxu0 0
  %929 = vmatpush2.bf16.msra.mxu0 0
  %930 = vmatprep.subr.bf16.mxu0 0
  %931 = vmatpush2.bf16.msra.mxu0 0
  %932 = vmatprep.subr.bf16.mxu0 0
  %933 = vmatpush2.bf16.msra.mxu0 0
  %934 = vmatprep.subr.bf16.mxu0 0
  %935 = vmatpush2.bf16.msra.mxu0 0
  %936 = vmatprep.subr.bf16.mxu0 0
  %937 = vmatpush2.bf16.msra.mxu0 0
  %938 = vmatprep.subr.bf16.mxu0 0
  %939 = vmatpush2.bf16.msra.mxu0 0
  %940 = vmatprep.mubr.bf16.mxu0 0
  %941 = vmatmul.mubr.bf16.gmra.mxu0 %v866
  %v942 = vpop.f32.mrf.mxu0
  %v943 = vadd.f32 0.0, %v942
  %v944 = vpop.f32.mrf.mxu0
  %v945 = vadd.f32 0.0, %v944
  %v946 = vpop.f32.mrf.mxu0
  %v947 = vpop.f32.mrf.mxu0
  %948 = vdwg.mxu0
  %s949 = scalar_lea.vmem [#allocation2], 32
  %v950 = vld [vmem:[%s949] sm:$0xff]
  %v951 = vld [vmem:[%s949 + $0x8] sm:$0xff]
  %v952 = vunpack.c.l.bf16 %v950
  %v953 = vunpack.c.h.bf16 %v950
  %v954 = vunpack.c.l.bf16 %v951
  %v955 = vunpack.c.h.bf16 %v951
  %s956 = scalar_lea.vmem [#allocation2], 80
  %v957 = vld [vmem:[%s956] sm:$0xff]
  %v958 = vld [vmem:[%s956 + $0x8] sm:$0xff]
  %v959 = vunpack.c.l.bf16 %v957
  %v960 = vunpack.c.h.bf16 %v957
  %v961 = vunpack.c.l.bf16 %v958
  %v962 = vunpack.c.h.bf16 %v958
  %v963 = vsel %vm411, %v952, %v959
  %v964 = vsel %vm412, %v953, %v960
  %v965 = vsel %vm413, %v954, %v961
  %v966 = vsel %vm414, %v955, %v962
  %v967 = vadd.f32 %v963, %v902
  %v968 = vadd.f32 %v964, %v904
  %v969 = vadd.f32 %v965, %v943
  %v970 = vadd.f32 %v966, %v945
  %v971 = vxor.u32 %v967, 2147483648
  %v972 = vxor.u32 %v968, 2147483648
  %v973 = vmul.f32 %v971, 1.442695
  %v974 = vpow.pop %v973
  %v975 = vmul.f32 %v972, 1.442695
  %v976 = vpow.pop %v975
  %v977 = vadd.f32 %v974, 1.0
  %v978 = vadd.f32 %v976, 1.0
  %v979 = vrcp.pop %v977
  %v980 = vmul.f32 1.0, %v979
  %v981 = vrcp.pop %v978
  %v982 = vmul.f32 1.0, %v981
  %v983 = vxor.u32 %v970, 2147483648
  %v984 = vmul.f32 %v983, 1.442695
  %v985 = vpow.pop %v984
  %v986 = vadd.f32 %v985, 1.0
  %v987 = vrcp.pop %v986
  %v988 = vmul.f32 1.0, %v987
  %v989 = vtanh.pop %v969
  %v990 = vmul.f32 %v982, %v861
  %v991 = vmul.f32 %v980, %v989
  %v992 = vadd.f32 %v990, %v991
  %v993 = vtanh.pop %v992
  %v994 = vmul.f32 %v988, %v993
  %v995 = vadd.f32 %v864, %v994
  %v996 = vmax.f32 %v865, %v994
  %v997 = vpack.c.bf16 %v994, %v994
  %998 = vmatprep.subr.bf16.mxu0 %v572
  %999 = vmatpush1.bf16.msra.mxu0 %v571
  %1000 = vmatprep.subr.bf16.mxu0 %v568
  %1001 = vmatpush1.bf16.msra.mxu0 %v567
  %1002 = vmatprep.subr.bf16.mxu0 %v564
  %1003 = vmatpush1.bf16.msra.mxu0 %v563
  %1004 = vmatprep.subr.bf16.mxu0 %v560
  %1005 = vmatpush1.bf16.msra.mxu0 %v559
  %1006 = vmatprep.subr.bf16.mxu0 %v556
  %1007 = vmatpush1.bf16.msra.mxu0 %v555
  %1008 = vmatprep.subr.bf16.mxu0 %v552
  %1009 = vmatpush1.bf16.msra.mxu0 %v551
  %1010 = vmatprep.subr.bf16.mxu0 %v548
  %1011 = vmatpush1.bf16.msra.mxu0 %v547
  %1012 = vmatprep.subr.bf16.mxu0 %v544
  %1013 = vmatpush1.bf16.msra.mxu0 %v543
  %1014 = vmatprep.subr.bf16.mxu0 0
  %1015 = vmatpush2.bf16.msra.mxu0 0
  %1016 = vmatprep.subr.bf16.mxu0 0
  %1017 = vmatpush2.bf16.msra.mxu0 0
  %1018 = vmatprep.subr.bf16.mxu0 0
  %1019 = vmatpush2.bf16.msra.mxu0 0
  %1020 = vmatprep.subr.bf16.mxu0 0
  %1021 = vmatpush2.bf16.msra.mxu0 0
  %1022 = vmatprep.subr.bf16.mxu0 0
  %1023 = vmatpush2.bf16.msra.mxu0 0
  %1024 = vmatprep.subr.bf16.mxu0 0
  %1025 = vmatpush2.bf16.msra.mxu0 0
  %1026 = vmatprep.subr.bf16.mxu0 0
  %1027 = vmatpush2.bf16.msra.mxu0 0
  %1028 = vmatprep.subr.bf16.mxu0 0
  %1029 = vmatpush2.bf16.msra.mxu0 0
  %1030 = vmatprep.mubr.bf16.mxu0 0
  %1031 = vmatmul.mubr.bf16.gmra.mxu0 %v997
  %v1032 = vpop.f32.mrf.mxu0
  %v1033 = vadd.f32 0.0, %v1032
  %v1034 = vpop.f32.mrf.mxu0
  %v1035 = vadd.f32 0.0, %v1034
  %v1036 = vpop.f32.mrf.mxu0
  %v1037 = vpop.f32.mrf.mxu0
  %1038 = vdwg.mxu0
  %1039 = vmatprep.subr.bf16.mxu0 %v574
  %1040 = vmatpush1.bf16.msra.mxu0 %v573
  %1041 = vmatprep.subr.bf16.mxu0 %v570
  %1042 = vmatpush1.bf16.msra.mxu0 %v569
  %1043 = vmatprep.subr.bf16.mxu0 %v566
  %1044 = vmatpush1.bf16.msra.mxu0 %v565
  %1045 = vmatprep.subr.bf16.mxu0 %v562
  %1046 = vmatpush1.bf16.msra.mxu0 %v561
  %1047 = vmatprep.subr.bf16.mxu0 %v558
  %1048 = vmatpush1.bf16.msra.mxu0 %v557
  %1049 = vmatprep.subr.bf16.mxu0 %v554
  %1050 = vmatpush1.bf16.msra.mxu0 %v553
  %1051 = vmatprep.subr.bf16.mxu0 %v550
  %1052 = vmatpush1.bf16.msra.mxu0 %v549
  %1053 = vmatprep.subr.bf16.mxu0 %v546
  %1054 = vmatpush1.bf16.msra.mxu0 %v545
  %1055 = vmatprep.subr.bf16.mxu0 0
  %1056 = vmatpush2.bf16.msra.mxu0 0
  %1057 = vmatprep.subr.bf16.mxu0 0
  %1058 = vmatpush2.bf16.msra.mxu0 0
  %1059 = vmatprep.subr.bf16.mxu0 0
  %1060 = vmatpush2.bf16.msra.mxu0 0
  %1061 = vmatprep.subr.bf16.mxu0 0
  %1062 = vmatpush2.bf16.msra.mxu0 0
  %1063 = vmatprep.subr.bf16.mxu0 0
  %1064 = vmatpush2.bf16.msra.mxu0 0
  %1065 = vmatprep.subr.bf16.mxu0 0
  %1066 = vmatpush2.bf16.msra.mxu0 0
  %1067 = vmatprep.subr.bf16.mxu0 0
  %1068 = vmatpush2.bf16.msra.mxu0 0
  %1069 = vmatprep.subr.bf16.mxu0 0
  %1070 = vmatpush2.bf16.msra.mxu0 0
  %1071 = vmatprep.mubr.bf16.mxu0 0
  %1072 = vmatmul.mubr.bf16.gmra.mxu0 %v997
  %v1073 = vpop.f32.mrf.mxu0
  %v1074 = vadd.f32 0.0, %v1073
  %v1075 = vpop.f32.mrf.mxu0
  %v1076 = vadd.f32 0.0, %v1075
  %v1077 = vpop.f32.mrf.mxu0
  %v1078 = vpop.f32.mrf.mxu0
  %1079 = vdwg.mxu0
  %s1080 = scalar_lea.vmem [#allocation2], 48
  %v1081 = vld [vmem:[%s1080] sm:$0xff]
  %v1082 = vld [vmem:[%s1080 + $0x8] sm:$0xff]
  %v1083 = vunpack.c.l.bf16 %v1081
  %v1084 = vunpack.c.h.bf16 %v1081
  %v1085 = vunpack.c.l.bf16 %v1082
  %v1086 = vunpack.c.h.bf16 %v1082
  %s1087 = scalar_lea.vmem [#allocation2], 64
  %v1088 = vld [vmem:[%s1087] sm:$0xff]
  %v1089 = vld [vmem:[%s1087 + $0x8] sm:$0xff]
  %v1090 = vunpack.c.l.bf16 %v1088
  %v1091 = vunpack.c.h.bf16 %v1088
  %v1092 = vunpack.c.l.bf16 %v1089
  %v1093 = vunpack.c.h.bf16 %v1089
  %v1094 = vsel %vm411, %v1083, %v1090
  %v1095 = vsel %vm412, %v1084, %v1091
  %v1096 = vsel %vm413, %v1085, %v1092
  %v1097 = vsel %vm414, %v1086, %v1093
  %v1098 = vadd.f32 %v1094, %v1033
  %v1099 = vadd.f32 %v1095, %v1035
  %v1100 = vadd.f32 %v1096, %v1074
  %v1101 = vadd.f32 %v1097, %v1076
  %v1102 = vxor.u32 %v1098, 2147483648
  %v1103 = vxor.u32 %v1099, 2147483648
  %v1104 = vmul.f32 %v1102, 1.442695
  %v1105 = vpow.pop %v1104
  %v1106 = vmul.f32 %v1103, 1.442695
  %v1107 = vpow.pop %v1106
  %v1108 = vadd.f32 %v1105, 1.0
  %v1109 = vadd.f32 %v1107, 1.0
  %v1110 = vrcp.pop %v1108
  %v1111 = vmul.f32 1.0, %v1110
  %v1112 = vrcp.pop %v1109
  %v1113 = vmul.f32 1.0, %v1112
  %v1114 = vxor.u32 %v1101, 2147483648
  %v1115 = vmul.f32 %v1114, 1.442695
  %v1116 = vpow.pop %v1115
  %v1117 = vadd.f32 %v1116, 1.0
  %v1118 = vrcp.pop %v1117
  %v1119 = vmul.f32 1.0, %v1118
  %v1120 = vtanh.pop %v1100
  %v1121 = vmul.f32 %v1113, %v992
  %v1122 = vmul.f32 %v1111, %v1120
  %v1123 = vadd.f32 %v1121, %v1122
  %v1124 = vtanh.pop %v1123
  %v1125 = vmul.f32 %v1119, %v1124
  %v1126 = vadd.f32 %v995, %v1125
  %v1127 = vmax.f32 %v996, %v1125
  %v1128 = vpack.c.bf16 %v1125, %v1125
  %1129 = vmatprep.subr.bf16.mxu0 %v572
  %1130 = vmatpush1.bf16.msra.mxu0 %v571
  %1131 = vmatprep.subr.bf16.mxu0 %v568
  %1132 = vmatpush1.bf16.msra.mxu0 %v567
  %1133 = vmatprep.subr.bf16.mxu0 %v564
  %1134 = vmatpush1.bf16.msra.mxu0 %v563
  %1135 = vmatprep.subr.bf16.mxu0 %v560
  %1136 = vmatpush1.bf16.msra.mxu0 %v559
  %1137 = vmatprep.subr.bf16.mxu0 %v556
  %1138 = vmatpush1.bf16.msra.mxu0 %v555
  %1139 = vmatprep.subr.bf16.mxu0 %v552
  %1140 = vmatpush1.bf16.msra.mxu0 %v551
  %1141 = vmatprep.subr.bf16.mxu0 %v548
  %1142 = vmatpush1.bf16.msra.mxu0 %v547
  %1143 = vmatprep.subr.bf16.mxu0 %v544
  %1144 = vmatpush1.bf16.msra.mxu0 %v543
  %1145 = vmatprep.subr.bf16.mxu0 0
  %1146 = vmatpush2.bf16.msra.mxu0 0
  %1147 = vmatprep.subr.bf16.mxu0 0
  %1148 = vmatpush2.bf16.msra.mxu0 0
  %1149 = vmatprep.subr.bf16.mxu0 0
  %1150 = vmatpush2.bf16.msra.mxu0 0
  %1151 = vmatprep.subr.bf16.mxu0 0
  %1152 = vmatpush2.bf16.msra.mxu0 0
  %1153 = vmatprep.subr.bf16.mxu0 0
  %1154 = vmatpush2.bf16.msra.mxu0 0
  %1155 = vmatprep.subr.bf16.mxu0 0
  %1156 = vmatpush2.bf16.msra.mxu0 0
  %1157 = vmatprep.subr.bf16.mxu0 0
  %1158 = vmatpush2.bf16.msra.mxu0 0
  %1159 = vmatprep.subr.bf16.mxu0 0
  %1160 = vmatpush2.bf16.msra.mxu0 0
  %1161 = vmatprep.mubr.bf16.mxu0 0
  %1162 = vmatmul.mubr.bf16.gmra.mxu0 %v1128
  %v1163 = vpop.f32.mrf.mxu0
  %v1164 = vadd.f32 0.0, %v1163
  %v1165 = vpop.f32.mrf.mxu0
  %v1166 = vadd.f32 0.0, %v1165
  %v1167 = vpop.f32.mrf.mxu0
  %v1168 = vpop.f32.mrf.mxu0
  %1169 = vdwg.mxu0
  %1170 = vmatprep.subr.bf16.mxu0 %v574
  %1171 = vmatpush1.bf16.msra.mxu0 %v573
  %1172 = vmatprep.subr.bf16.mxu0 %v570
  %1173 = vmatpush1.bf16.msra.mxu0 %v569
  %1174 = vmatprep.subr.bf16.mxu0 %v566
  %1175 = vmatpush1.bf16.msra.mxu0 %v565
  %1176 = vmatprep.subr.bf16.mxu0 %v562
  %1177 = vmatpush1.bf16.msra.mxu0 %v561
  %1178 = vmatprep.subr.bf16.mxu0 %v558
  %1179 = vmatpush1.bf16.msra.mxu0 %v557
  %1180 = vmatprep.subr.bf16.mxu0 %v554
  %1181 = vmatpush1.bf16.msra.mxu0 %v553
  %1182 = vmatprep.subr.bf16.mxu0 %v550
  %1183 = vmatpush1.bf16.msra.mxu0 %v549
  %1184 = vmatprep.subr.bf16.mxu0 %v546
  %1185 = vmatpush1.bf16.msra.mxu0 %v545
  %1186 = vmatprep.subr.bf16.mxu0 0
  %1187 = vmatpush2.bf16.msra.mxu0 0
  %1188 = vmatprep.subr.bf16.mxu0 0
  %1189 = vmatpush2.bf16.msra.mxu0 0
  %1190 = vmatprep.subr.bf16.mxu0 0
  %1191 = vmatpush2.bf16.msra.mxu0 0
  %1192 = vmatprep.subr.bf16.mxu0 0
  %1193 = vmatpush2.bf16.msra.mxu0 0
  %1194 = vmatprep.subr.bf16.mxu0 0
  %1195 = vmatpush2.bf16.msra.mxu0 0
  %1196 = vmatprep.subr.bf16.mxu0 0
  %1197 = vmatpush2.bf16.msra.mxu0 0
  %1198 = vmatprep.subr.bf16.mxu0 0
  %1199 = vmatpush2.bf16.msra.mxu0 0
  %1200 = vmatprep.subr.bf16.mxu0 0
  %1201 = vmatpush2.bf16.msra.mxu0 0
  %1202 = vmatprep.mubr.bf16.mxu0 0
  %1203 = vmatmul.mubr.bf16.gmra.mxu0 %v1128
  %v1204 = vpop.f32.mrf.mxu0
  %v1205 = vadd.f32 0.0, %v1204
  %v1206 = vpop.f32.mrf.mxu0
  %v1207 = vadd.f32 0.0, %v1206
  %v1208 = vpop.f32.mrf.mxu0
  %v1209 = vpop.f32.mrf.mxu0
  %1210 = vdwg.mxu0
  %v1211 = vsel %vm411, %v1090, %v1083
  %v1212 = vsel %vm412, %v1091, %v1084
  %v1213 = vsel %vm413, %v1092, %v1085
  %v1214 = vsel %vm414, %v1093, %v1086
  %v1215 = vadd.f32 %v1211, %v1164
  %v1216 = vadd.f32 %v1212, %v1166
  %v1217 = vadd.f32 %v1213, %v1205
  %v1218 = vadd.f32 %v1214, %v1207
  %v1219 = vxor.u32 %v1215, 2147483648
  %v1220 = vxor.u32 %v1216, 2147483648
  %v1221 = vmul.f32 %v1219, 1.442695
  %v1222 = vpow.pop %v1221
  %v1223 = vmul.f32 %v1220, 1.442695
  %v1224 = vpow.pop %v1223
  %v1225 = vadd.f32 %v1222, 1.0
  %v1226 = vadd.f32 %v1224, 1.0
  %v1227 = vrcp.pop %v1225
  %v1228 = vmul.f32 1.0, %v1227
  %v1229 = vrcp.pop %v1226
  %v1230 = vmul.f32 1.0, %v1229
  %v1231 = vxor.u32 %v1218, 2147483648
  %v1232 = vmul.f32 %v1231, 1.442695
  %v1233 = vpow.pop %v1232
  %v1234 = vadd.f32 %v1233, 1.0
  %v1235 = vrcp.pop %v1234
  %v1236 = vmul.f32 1.0, %v1235
  %v1237 = vtanh.pop %v1217
  %v1238 = vmul.f32 %v1230, %v1123
  %v1239 = vmul.f32 %v1228, %v1237
  %v1240 = vadd.f32 %v1238, %v1239
  %v1241 = vtanh.pop %v1240
  %v1242 = vmul.f32 %v1236, %v1241
  %v1243 = vadd.f32 %v1126, %v1242
  %v1244 = vmax.f32 %v1127, %v1242
  %v1245 = vpack.c.bf16 %v1242, %v1242
  %1246 = vmatprep.subr.bf16.mxu0 %v572
  %1247 = vmatpush1.bf16.msra.mxu0 %v571
  %1248 = vmatprep.subr.bf16.mxu0 %v568
  %1249 = vmatpush1.bf16.msra.mxu0 %v567
  %1250 = vmatprep.subr.bf16.mxu0 %v564
  %1251 = vmatpush1.bf16.msra.mxu0 %v563
  %1252 = vmatprep.subr.bf16.mxu0 %v560
  %1253 = vmatpush1.bf16.msra.mxu0 %v559
  %1254 = vmatprep.subr.bf16.mxu0 %v556
  %1255 = vmatpush1.bf16.msra.mxu0 %v555
  %1256 = vmatprep.subr.bf16.mxu0 %v552
  %1257 = vmatpush1.bf16.msra.mxu0 %v551
  %1258 = vmatprep.subr.bf16.mxu0 %v548
  %1259 = vmatpush1.bf16.msra.mxu0 %v547
  %1260 = vmatprep.subr.bf16.mxu0 %v544
  %1261 = vmatpush1.bf16.msra.mxu0 %v543
  %1262 = vmatprep.subr.bf16.mxu0 0
  %1263 = vmatpush2.bf16.msra.mxu0 0
  %1264 = vmatprep.subr.bf16.mxu0 0
  %1265 = vmatpush2.bf16.msra.mxu0 0
  %1266 = vmatprep.subr.bf16.mxu0 0
  %1267 = vmatpush2.bf16.msra.mxu0 0
  %1268 = vmatprep.subr.bf16.mxu0 0
  %1269 = vmatpush2.bf16.msra.mxu0 0
  %1270 = vmatprep.subr.bf16.mxu0 0
  %1271 = vmatpush2.bf16.msra.mxu0 0
  %1272 = vmatprep.subr.bf16.mxu0 0
  %1273 = vmatpush2.bf16.msra.mxu0 0
  %1274 = vmatprep.subr.bf16.mxu0 0
  %1275 = vmatpush2.bf16.msra.mxu0 0
  %1276 = vmatprep.subr.bf16.mxu0 0
  %1277 = vmatpush2.bf16.msra.mxu0 0
  %1278 = vmatprep.mubr.bf16.mxu0 0
  %1279 = vmatmul.mubr.bf16.gmra.mxu0 %v1245
  %v1280 = vpop.f32.mrf.mxu0
  %v1281 = vadd.f32 0.0, %v1280
  %v1282 = vpop.f32.mrf.mxu0
  %v1283 = vadd.f32 0.0, %v1282
  %v1284 = vpop.f32.mrf.mxu0
  %v1285 = vpop.f32.mrf.mxu0
  %1286 = vdwg.mxu0
  %1287 = vmatprep.subr.bf16.mxu0 %v574
  %1288 = vmatpush1.bf16.msra.mxu0 %v573
  %1289 = vmatprep.subr.bf16.mxu0 %v570
  %1290 = vmatpush1.bf16.msra.mxu0 %v569
  %1291 = vmatprep.subr.bf16.mxu0 %v566
  %1292 = vmatpush1.bf16.msra.mxu0 %v565
  %1293 = vmatprep.subr.bf16.mxu0 %v562
  %1294 = vmatpush1.bf16.msra.mxu0 %v561
  %1295 = vmatprep.subr.bf16.mxu0 %v558
  %1296 = vmatpush1.bf16.msra.mxu0 %v557
  %1297 = vmatprep.subr.bf16.mxu0 %v554
  %1298 = vmatpush1.bf16.msra.mxu0 %v553
  %1299 = vmatprep.subr.bf16.mxu0 %v550
  %1300 = vmatpush1.bf16.msra.mxu0 %v549
  %1301 = vmatprep.subr.bf16.mxu0 %v546
  %1302 = vmatpush1.bf16.msra.mxu0 %v545
  %1303 = vmatprep.subr.bf16.mxu0 0
  %1304 = vmatpush2.bf16.msra.mxu0 0
  %1305 = vmatprep.subr.bf16.mxu0 0
  %1306 = vmatpush2.bf16.msra.mxu0 0
  %1307 = vmatprep.subr.bf16.mxu0 0
  %1308 = vmatpush2.bf16.msra.mxu0 0
  %1309 = vmatprep.subr.bf16.mxu0 0
  %1310 = vmatpush2.bf16.msra.mxu0 0
  %1311 = vmatprep.subr.bf16.mxu0 0
  %1312 = vmatpush2.bf16.msra.mxu0 0
  %1313 = vmatprep.subr.bf16.mxu0 0
  %1314 = vmatpush2.bf16.msra.mxu0 0
  %1315 = vmatprep.subr.bf16.mxu0 0
  %1316 = vmatpush2.bf16.msra.mxu0 0
  %1317 = vmatprep.subr.bf16.mxu0 0
  %1318 = vmatpush2.bf16.msra.mxu0 0
  %1319 = vmatprep.mubr.bf16.mxu0 0
  %1320 = vmatmul.mubr.bf16.gmra.mxu0 %v1245
  %v1321 = vpop.f32.mrf.mxu0
  %v1322 = vadd.f32 0.0, %v1321
  %v1323 = vpop.f32.mrf.mxu0
  %v1324 = vadd.f32 0.0, %v1323
  %v1325 = vpop.f32.mrf.mxu0
  %v1326 = vpop.f32.mrf.mxu0
  %1327 = vdwg.mxu0
  %v1328 = vsel %vm411, %v959, %v952
  %v1329 = vsel %vm412, %v960, %v953
  %v1330 = vsel %vm413, %v961, %v954
  %v1331 = vsel %vm414, %v962, %v955
  %v1332 = vadd.f32 %v1328, %v1281
  %v1333 = vadd.f32 %v1329, %v1283
  %v1334 = vadd.f32 %v1330, %v1322
  %v1335 = vadd.f32 %v1331, %v1324
  %v1336 = vxor.u32 %v1332, 2147483648
  %v1337 = vxor.u32 %v1333, 2147483648
  %v1338 = vmul.f32 %v1336, 1.442695
  %v1339 = vpow.pop %v1338
  %v1340 = vmul.f32 %v1337, 1.442695
  %v1341 = vpow.pop %v1340
  %v1342 = vadd.f32 %v1339, 1.0
  %v1343 = vadd.f32 %v1341, 1.0
  %v1344 = vrcp.pop %v1342
  %v1345 = vmul.f32 1.0, %v1344
  %v1346 = vrcp.pop %v1343
  %v1347 = vmul.f32 1.0, %v1346
  %v1348 = vxor.u32 %v1335, 2147483648
  %v1349 = vmul.f32 %v1348, 1.442695
  %v1350 = vpow.pop %v1349
  %v1351 = vadd.f32 %v1350, 1.0
  %v1352 = vrcp.pop %v1351
  %v1353 = vmul.f32 1.0, %v1352
  %v1354 = vtanh.pop %v1334
  %v1355 = vmul.f32 %v1347, %v1240
  %v1356 = vmul.f32 %v1345, %v1354
  %v1357 = vadd.f32 %v1355, %v1356
  %v1358 = vtanh.pop %v1357
  %v1359 = vmul.f32 %v1353, %v1358
  %v1360 = vadd.f32 %v1243, %v1359
  %v1361 = vmax.f32 %v1244, %v1359
  %v1362 = vpack.c.bf16 %v1359, %v1359
  %1363 = vmatprep.subr.bf16.mxu0 %v572
  %1364 = vmatpush1.bf16.msra.mxu0 %v571
  %1365 = vmatprep.subr.bf16.mxu0 %v568
  %1366 = vmatpush1.bf16.msra.mxu0 %v567
  %1367 = vmatprep.subr.bf16.mxu0 %v564
  %1368 = vmatpush1.bf16.msra.mxu0 %v563
  %1369 = vmatprep.subr.bf16.mxu0 %v560
  %1370 = vmatpush1.bf16.msra.mxu0 %v559
  %1371 = vmatprep.subr.bf16.mxu0 %v556
  %1372 = vmatpush1.bf16.msra.mxu0 %v555
  %1373 = vmatprep.subr.bf16.mxu0 %v552
  %1374 = vmatpush1.bf16.msra.mxu0 %v551
  %1375 = vmatprep.subr.bf16.mxu0 %v548
  %1376 = vmatpush1.bf16.msra.mxu0 %v547
  %1377 = vmatprep.subr.bf16.mxu0 %v544
  %1378 = vmatpush1.bf16.msra.mxu0 %v543
  %1379 = vmatprep.subr.bf16.mxu0 0
  %1380 = vmatpush2.bf16.msra.mxu0 0
  %1381 = vmatprep.subr.bf16.mxu0 0
  %1382 = vmatpush2.bf16.msra.mxu0 0
  %1383 = vmatprep.subr.bf16.mxu0 0
  %1384 = vmatpush2.bf16.msra.mxu0 0
  %1385 = vmatprep.subr.bf16.mxu0 0
  %1386 = vmatpush2.bf16.msra.mxu0 0
  %1387 = vmatprep.subr.bf16.mxu0 0
  %1388 = vmatpush2.bf16.msra.mxu0 0
  %1389 = vmatprep.subr.bf16.mxu0 0
  %1390 = vmatpush2.bf16.msra.mxu0 0
  %1391 = vmatprep.subr.bf16.mxu0 0
  %1392 = vmatpush2.bf16.msra.mxu0 0
  %1393 = vmatprep.subr.bf16.mxu0 0
  %1394 = vmatpush2.bf16.msra.mxu0 0
  %1395 = vmatprep.mubr.bf16.mxu0 0
  %1396 = vmatmul.mubr.bf16.gmra.mxu0 %v1362
  %v1397 = vpop.f32.mrf.mxu0
  %v1398 = vadd.f32 0.0, %v1397
  %v1399 = vpop.f32.mrf.mxu0
  %v1400 = vadd.f32 0.0, %v1399
  %v1401 = vpop.f32.mrf.mxu0
  %v1402 = vpop.f32.mrf.mxu0
  %1403 = vdwg.mxu0
  %1404 = vmatprep.subr.bf16.mxu0 %v574
  %1405 = vmatpush1.bf16.msra.mxu0 %v573
  %1406 = vmatprep.subr.bf16.mxu0 %v570
  %1407 = vmatpush1.bf16.msra.mxu0 %v569
  %1408 = vmatprep.subr.bf16.mxu0 %v566
  %1409 = vmatpush1.bf16.msra.mxu0 %v565
  %1410 = vmatprep.subr.bf16.mxu0 %v562
  %1411 = vmatpush1.bf16.msra.mxu0 %v561
  %1412 = vmatprep.subr.bf16.mxu0 %v558
  %1413 = vmatpush1.bf16.msra.mxu0 %v557
  %1414 = vmatprep.subr.bf16.mxu0 %v554
  %1415 = vmatpush1.bf16.msra.mxu0 %v553
  %1416 = vmatprep.subr.bf16.mxu0 %v550
  %1417 = vmatpush1.bf16.msra.mxu0 %v549
  %1418 = vmatprep.subr.bf16.mxu0 %v546
  %1419 = vmatpush1.bf16.msra.mxu0 %v545
  %1420 = vmatprep.subr.bf16.mxu0 0
  %1421 = vmatpush2.bf16.msra.mxu0 0
  %1422 = vmatprep.subr.bf16.mxu0 0
  %1423 = vmatpush2.bf16.msra.mxu0 0
  %1424 = vmatprep.subr.bf16.mxu0 0
  %1425 = vmatpush2.bf16.msra.mxu0 0
  %1426 = vmatprep.subr.bf16.mxu0 0
  %1427 = vmatpush2.bf16.msra.mxu0 0
  %1428 = vmatprep.subr.bf16.mxu0 0
  %1429 = vmatpush2.bf16.msra.mxu0 0
  %1430 = vmatprep.subr.bf16.mxu0 0
  %1431 = vmatpush2.bf16.msra.mxu0 0
  %1432 = vmatprep.subr.bf16.mxu0 0
  %1433 = vmatpush2.bf16.msra.mxu0 0
  %1434 = vmatprep.subr.bf16.mxu0 0
  %1435 = vmatpush2.bf16.msra.mxu0 0
  %1436 = vmatprep.mubr.bf16.mxu0 0
  %1437 = vmatmul.mubr.bf16.gmra.mxu0 %v1362
  %v1438 = vpop.f32.mrf.mxu0
  %v1439 = vadd.f32 0.0, %v1438
  %v1440 = vpop.f32.mrf.mxu0
  %v1441 = vadd.f32 0.0, %v1440
  %v1442 = vpop.f32.mrf.mxu0
  %v1443 = vpop.f32.mrf.mxu0
  %1444 = vdwg.mxu0
  %v1445 = vsel %vm411, %v828, %v821
  %v1446 = vsel %vm412, %v829, %v822
  %v1447 = vsel %vm413, %v830, %v823
  %v1448 = vsel %vm414, %v831, %v824
  %v1449 = vadd.f32 %v1445, %v1398
  %v1450 = vadd.f32 %v1446, %v1400
  %v1451 = vadd.f32 %v1447, %v1439
  %v1452 = vadd.f32 %v1448, %v1441
  %v1453 = vxor.u32 %v1449, 2147483648
  %v1454 = vxor.u32 %v1450, 2147483648
  %v1455 = vmul.f32 %v1453, 1.442695
  %v1456 = vpow.pop %v1455
  %v1457 = vmul.f32 %v1454, 1.442695
  %v1458 = vpow.pop %v1457
  %v1459 = vadd.f32 %v1456, 1.0
  %v1460 = vadd.f32 %v1458, 1.0
  %v1461 = vrcp.pop %v1459
  %v1462 = vmul.f32 1.0, %v1461
  %v1463 = vrcp.pop %v1460
  %v1464 = vmul.f32 1.0, %v1463
  %v1465 = vxor.u32 %v1452, 2147483648
  %v1466 = vmul.f32 %v1465, 1.442695
  %v1467 = vpow.pop %v1466
  %v1468 = vadd.f32 %v1467, 1.0
  %v1469 = vrcp.pop %v1468
  %v1470 = vmul.f32 1.0, %v1469
  %v1471 = vtanh.pop %v1451
  %v1472 = vmul.f32 %v1464, %v1357
  %v1473 = vmul.f32 %v1462, %v1471
  %v1474 = vadd.f32 %v1472, %v1473
  %v1475 = vtanh.pop %v1474
  %v1476 = vmul.f32 %v1470, %v1475
  %v1477 = vadd.f32 %v1360, %v1476
  %v1478 = vmax.f32 %v1361, %v1476
  %v1479 = vpack.c.bf16 %v1476, %v1476
  %1480 = vmatprep.subr.bf16.mxu0 %v572
  %1481 = vmatpush1.bf16.msra.mxu0 %v571
  %1482 = vmatprep.subr.bf16.mxu0 %v568
  %1483 = vmatpush1.bf16.msra.mxu0 %v567
  %1484 = vmatprep.subr.bf16.mxu0 %v564
  %1485 = vmatpush1.bf16.msra.mxu0 %v563
  %1486 = vmatprep.subr.bf16.mxu0 %v560
  %1487 = vmatpush1.bf16.msra.mxu0 %v559
  %1488 = vmatprep.subr.bf16.mxu0 %v556
  %1489 = vmatpush1.bf16.msra.mxu0 %v555
  %1490 = vmatprep.subr.bf16.mxu0 %v552
  %1491 = vmatpush1.bf16.msra.mxu0 %v551
  %1492 = vmatprep.subr.bf16.mxu0 %v548
  %1493 = vmatpush1.bf16.msra.mxu0 %v547
  %1494 = vmatprep.subr.bf16.mxu0 %v544
  %1495 = vmatpush1.bf16.msra.mxu0 %v543
  %1496 = vmatprep.subr.bf16.mxu0 0
  %1497 = vmatpush2.bf16.msra.mxu0 0
  %1498 = vmatprep.subr.bf16.mxu0 0
  %1499 = vmatpush2.bf16.msra.mxu0 0
  %1500 = vmatprep.subr.bf16.mxu0 0
  %1501 = vmatpush2.bf16.msra.mxu0 0
  %1502 = vmatprep.subr.bf16.mxu0 0
  %1503 = vmatpush2.bf16.msra.mxu0 0
  %1504 = vmatprep.subr.bf16.mxu0 0
  %1505 = vmatpush2.bf16.msra.mxu0 0
  %1506 = vmatprep.subr.bf16.mxu0 0
  %1507 = vmatpush2.bf16.msra.mxu0 0
  %1508 = vmatprep.subr.bf16.mxu0 0
  %1509 = vmatpush2.bf16.msra.mxu0 0
  %1510 = vmatprep.subr.bf16.mxu0 0
  %1511 = vmatpush2.bf16.msra.mxu0 0
  %1512 = vmatprep.mubr.bf16.mxu0 0
  %1513 = vmatmul.mubr.bf16.gmra.mxu0 %v1479
  %v1514 = vpop.f32.mrf.mxu0
  %v1515 = vadd.f32 0.0, %v1514
  %v1516 = vpop.f32.mrf.mxu0
  %v1517 = vadd.f32 0.0, %v1516
  %v1518 = vpop.f32.mrf.mxu0
  %v1519 = vpop.f32.mrf.mxu0
  %1520 = vdwg.mxu0
  %1521 = vmatprep.subr.bf16.mxu0 %v574
  %1522 = vmatpush1.bf16.msra.mxu0 %v573
  %1523 = vmatprep.subr.bf16.mxu0 %v570
  %1524 = vmatpush1.bf16.msra.mxu0 %v569
  %1525 = vmatprep.subr.bf16.mxu0 %v566
  %1526 = vmatpush1.bf16.msra.mxu0 %v565
  %1527 = vmatprep.subr.bf16.mxu0 %v562
  %1528 = vmatpush1.bf16.msra.mxu0 %v561
  %1529 = vmatprep.subr.bf16.mxu0 %v558
  %1530 = vmatpush1.bf16.msra.mxu0 %v557
  %1531 = vmatprep.subr.bf16.mxu0 %v554
  %1532 = vmatpush1.bf16.msra.mxu0 %v553
  %1533 = vmatprep.subr.bf16.mxu0 %v550
  %1534 = vmatpush1.bf16.msra.mxu0 %v549
  %1535 = vmatprep.subr.bf16.mxu0 %v546
  %1536 = vmatpush1.bf16.msra.mxu0 %v545
  %1537 = vmatprep.subr.bf16.mxu0 0
  %1538 = vmatpush2.bf16.msra.mxu0 0
  %1539 = vmatprep.subr.bf16.mxu0 0
  %1540 = vmatpush2.bf16.msra.mxu0 0
  %1541 = vmatprep.subr.bf16.mxu0 0
  %1542 = vmatpush2.bf16.msra.mxu0 0
  %1543 = vmatprep.subr.bf16.mxu0 0
  %1544 = vmatpush2.bf16.msra.mxu0 0
  %1545 = vmatprep.subr.bf16.mxu0 0
  %1546 = vmatpush2.bf16.msra.mxu0 0
  %1547 = vmatprep.subr.bf16.mxu0 0
  %1548 = vmatpush2.bf16.msra.mxu0 0
  %1549 = vmatprep.subr.bf16.mxu0 0
  %1550 = vmatpush2.bf16.msra.mxu0 0
  %1551 = vmatprep.subr.bf16.mxu0 0
  %1552 = vmatpush2.bf16.msra.mxu0 0
  %1553 = vmatprep.mubr.bf16.mxu0 0
  %1554 = vmatmul.mubr.bf16.gmra.mxu0 %v1479
  %v1555 = vpop.f32.mrf.mxu0
  %v1556 = vadd.f32 0.0, %v1555
  %v1557 = vpop.f32.mrf.mxu0
  %v1558 = vadd.f32 0.0, %v1557
  %v1559 = vpop.f32.mrf.mxu0
  %v1560 = vpop.f32.mrf.mxu0
  %1561 = vdwg.mxu0
  %v1562 = vsel %vm411, %v698, %v691
  %v1563 = vsel %vm412, %v699, %v692
  %v1564 = vsel %vm413, %v700, %v693
  %v1565 = vsel %vm414, %v701, %v694
  %v1566 = vadd.f32 %v1562, %v1515
  %v1567 = vadd.f32 %v1563, %v1517
  %v1568 = vadd.f32 %v1564, %v1556
  %v1569 = vadd.f32 %v1565, %v1558
  %v1570 = vxor.u32 %v1566, 2147483648
  %v1571 = vxor.u32 %v1567, 2147483648
  %v1572 = vmul.f32 %v1570, 1.442695
  %v1573 = vpow.pop %v1572
  %v1574 = vmul.f32 %v1571, 1.442695
  %v1575 = vpow.pop %v1574
  %v1576 = vadd.f32 %v1573, 1.0
  %v1577 = vadd.f32 %v1575, 1.0
  %v1578 = vrcp.pop %v1576
  %v1579 = vmul.f32 1.0, %v1578
  %v1580 = vrcp.pop %v1577
  %v1581 = vmul.f32 1.0, %v1580
  %v1582 = vxor.u32 %v1569, 2147483648
  %v1583 = vmul.f32 %v1582, 1.442695
  %v1584 = vpow.pop %v1583
  %v1585 = vadd.f32 %v1584, 1.0
  %v1586 = vrcp.pop %v1585
  %v1587 = vmul.f32 1.0, %v1586
  %v1588 = vtanh.pop %v1568
  %v1589 = vmul.f32 %v1581, %v1474
  %v1590 = vmul.f32 %v1579, %v1588
  %v1591 = vadd.f32 %v1589, %v1590
  %v1592 = vtanh.pop %v1591
  %v1593 = vmul.f32 %v1587, %v1592
  %v1594 = vadd.f32 %v1477, %v1593
  %v1595 = vmax.f32 %v1478, %v1593
  %v1596 = vmul.f32 %v1594, 0.125
  %v1597 = vpack.c.bf16 %v1596, %v1596
  %v1598 = vld [vmem:[%s4] sm:$0xf]
  %v1599 = vld [vmem:[%s4 + $0x4] sm:$0xf]
  %v1600 = vld [vmem:[%s4 + $0x8] sm:$0xf]
  %v1601 = vld [vmem:[%s4 + $0xc] sm:$0xf]
  %v1602 = vld [vmem:[%s4 + $0x10] sm:$0xf]
  %v1603 = vld [vmem:[%s4 + $0x14] sm:$0xf]
  %v1604 = vld [vmem:[%s4 + $0x18] sm:$0xf]
  %v1605 = vld [vmem:[%s4 + $0x1c] sm:$0xf]
  %v1606 = vld [vmem:[%s4 + $0x20] sm:$0xf]
  %v1607 = vld [vmem:[%s4 + $0x24] sm:$0xf]
  %v1608 = vld [vmem:[%s4 + $0x28] sm:$0xf]
  %v1609 = vld [vmem:[%s4 + $0x2c] sm:$0xf]
  %v1610 = vld [vmem:[%s4 + $0x30] sm:$0xf]
  %v1611 = vld [vmem:[%s4 + $0x34] sm:$0xf]
  %v1612 = vld [vmem:[%s4 + $0x38] sm:$0xf]
  %v1613 = vld [vmem:[%s4 + $0x3c] sm:$0xf]
  %v1614 = vpack.c.bf16 %v1595, %v1595
  %v1615 = vld [vmem:[%s5] sm:$0xf]
  %v1616 = vld [vmem:[%s5 + $0x4] sm:$0xf]
  %v1617 = vld [vmem:[%s5 + $0x8] sm:$0xf]
  %v1618 = vld [vmem:[%s5 + $0xc] sm:$0xf]
  %v1619 = vld [vmem:[%s5 + $0x10] sm:$0xf]
  %v1620 = vld [vmem:[%s5 + $0x14] sm:$0xf]
  %v1621 = vld [vmem:[%s5 + $0x18] sm:$0xf]
  %v1622 = vld [vmem:[%s5 + $0x1c] sm:$0xf]
  %v1623 = vld [vmem:[%s5 + $0x20] sm:$0xf]
  %v1624 = vld [vmem:[%s5 + $0x24] sm:$0xf]
  %v1625 = vld [vmem:[%s5 + $0x28] sm:$0xf]
  %v1626 = vld [vmem:[%s5 + $0x2c] sm:$0xf]
  %v1627 = vld [vmem:[%s5 + $0x30] sm:$0xf]
  %v1628 = vld [vmem:[%s5 + $0x34] sm:$0xf]
  %v1629 = vld [vmem:[%s5 + $0x38] sm:$0xf]
  %v1630 = vld [vmem:[%s5 + $0x3c] sm:$0xf]
  %v1647 = vunpack.c.l.b16 %v1615
  %v1648 = vunpack.c.l.b16 %v1616
  %v1649 = vunpack.c.l.b16 %v1617
  %v1650 = vunpack.c.l.b16 %v1618
  %v1651 = vunpack.c.l.b16 %v1619
  %v1652 = vunpack.c.l.b16 %v1620
  %v1653 = vunpack.c.l.b16 %v1621
  %v1654 = vunpack.c.l.b16 %v1622
  %v1655 = vunpack.c.l.b16 %v1623
  %v1656 = vunpack.c.l.b16 %v1624
  %v1657 = vunpack.c.l.b16 %v1625
  %v1658 = vunpack.c.l.b16 %v1626
  %v1659 = vunpack.c.l.b16 %v1627
  %v1660 = vunpack.c.l.b16 %v1628
  %v1661 = vunpack.c.l.b16 %v1629
  %v1662 = vunpack.c.l.b16 %v1630
  %v1663 = vpack.c.b16 %v1648, %v1647
  %v1664 = vpack.c.b16 %v1650, %v1649
  %v1665 = vpack.c.b16 %v1652, %v1651
  %v1666 = vpack.c.b16 %v1654, %v1653
  %v1667 = vpack.c.b16 %v1656, %v1655
  %v1668 = vpack.c.b16 %v1658, %v1657
  %v1669 = vpack.c.b16 %v1660, %v1659
  %v1670 = vpack.c.b16 %v1662, %v1661
  %1679 = vmatprep.subr.bf16.mxu0 0
  %1680 = vmatpush1.bf16.msra.mxu0 %v1670
  %1681 = vmatprep.subr.bf16.mxu0 0
  %1682 = vmatpush1.bf16.msra.mxu0 %v1669
  %1683 = vmatprep.subr.bf16.mxu0 0
  %1684 = vmatpush1.bf16.msra.mxu0 %v1668
  %1685 = vmatprep.subr.bf16.mxu0 0
  %1686 = vmatpush1.bf16.msra.mxu0 %v1667
  %1687 = vmatprep.subr.bf16.mxu0 0
  %1688 = vmatpush1.bf16.msra.mxu0 %v1666
  %1689 = vmatprep.subr.bf16.mxu0 0
  %1690 = vmatpush1.bf16.msra.mxu0 %v1665
  %1691 = vmatprep.subr.bf16.mxu0 0
  %1692 = vmatpush1.bf16.msra.mxu0 %v1664
  %1693 = vmatprep.subr.bf16.mxu0 0
  %1694 = vmatpush1.bf16.msra.mxu0 %v1663
  %1695 = vmatprep.subr.bf16.mxu0 0
  %1696 = vmatpush2.bf16.msra.mxu0 0
  %1697 = vmatprep.subr.bf16.mxu0 0
  %1698 = vmatpush2.bf16.msra.mxu0 0
  %1699 = vmatprep.subr.bf16.mxu0 0
  %1700 = vmatpush2.bf16.msra.mxu0 0
  %1701 = vmatprep.subr.bf16.mxu0 0
  %1702 = vmatpush2.bf16.msra.mxu0 0
  %1703 = vmatprep.subr.bf16.mxu0 0
  %1704 = vmatpush2.bf16.msra.mxu0 0
  %1705 = vmatprep.subr.bf16.mxu0 0
  %1706 = vmatpush2.bf16.msra.mxu0 0
  %1707 = vmatprep.subr.bf16.mxu0 0
  %1708 = vmatpush2.bf16.msra.mxu0 0
  %1709 = vmatprep.subr.bf16.mxu0 0
  %1710 = vmatpush2.bf16.msra.mxu0 0
  %1711 = vmatprep.mubr.bf16.mxu0 0
  %1712 = vmatmul.mubr.bf16.gmra.mxu0 %v1614
  %v1713 = vpop.f32.mrf.mxu0
  %v1714 = vadd.f32 0.0, %v1713
  %v1715 = vpop.f32.mrf.mxu0
  %v1716 = vpop.f32.mrf.mxu0
  %v1717 = vpop.f32.mrf.mxu0
  %1718 = vdwg.mxu0
  %v1735 = vunpack.c.l.b16 %v1598
  %v1736 = vunpack.c.l.b16 %v1599
  %v1737 = vunpack.c.l.b16 %v1600
  %v1738 = vunpack.c.l.b16 %v1601
  %v1739 = vunpack.c.l.b16 %v1602
  %v1740 = vunpack.c.l.b16 %v1603
  %v1741 = vunpack.c.l.b16 %v1604
  %v1742 = vunpack.c.l.b16 %v1605
  %v1743 = vunpack.c.l.b16 %v1606
  %v1744 = vunpack.c.l.b16 %v1607
  %v1745 = vunpack.c.l.b16 %v1608
  %v1746 = vunpack.c.l.b16 %v1609
  %v1747 = vunpack.c.l.b16 %v1610
  %v1748 = vunpack.c.l.b16 %v1611
  %v1749 = vunpack.c.l.b16 %v1612
  %v1750 = vunpack.c.l.b16 %v1613
  %v1751 = vpack.c.b16 %v1736, %v1735
  %v1752 = vpack.c.b16 %v1738, %v1737
  %v1753 = vpack.c.b16 %v1740, %v1739
  %v1754 = vpack.c.b16 %v1742, %v1741
  %v1755 = vpack.c.b16 %v1744, %v1743
  %v1756 = vpack.c.b16 %v1746, %v1745
  %v1757 = vpack.c.b16 %v1748, %v1747
  %v1758 = vpack.c.b16 %v1750, %v1749
  %1767 = vmatprep.subr.bf16.mxu0 0
  %1768 = vmatpush1.bf16.msra.mxu0 %v1758
  %1769 = vmatprep.subr.bf16.mxu0 0
  %1770 = vmatpush1.bf16.msra.mxu0 %v1757
  %1771 = vmatprep.subr.bf16.mxu0 0
  %1772 = vmatpush1.bf16.msra.mxu0 %v1756
  %1773 = vmatprep.subr.bf16.mxu0 0
  %1774 = vmatpush1.bf16.msra.mxu0 %v1755
  %1775 = vmatprep.subr.bf16.mxu0 0
  %1776 = vmatpush1.bf16.msra.mxu0 %v1754
  %1777 = vmatprep.subr.bf16.mxu0 0
  %1778 = vmatpush1.bf16.msra.mxu0 %v1753
  %1779 = vmatprep.subr.bf16.mxu0 0
  %1780 = vmatpush1.bf16.msra.mxu0 %v1752
  %1781 = vmatprep.subr.bf16.mxu0 0
  %1782 = vmatpush1.bf16.msra.mxu0 %v1751
  %1783 = vmatprep.subr.bf16.mxu0 0
  %1784 = vmatpush2.bf16.msra.mxu0 0
  %1785 = vmatprep.subr.bf16.mxu0 0
  %1786 = vmatpush2.bf16.msra.mxu0 0
  %1787 = vmatprep.subr.bf16.mxu0 0
  %1788 = vmatpush2.bf16.msra.mxu0 0
  %1789 = vmatprep.subr.bf16.mxu0 0
  %1790 = vmatpush2.bf16.msra.mxu0 0
  %1791 = vmatprep.subr.bf16.mxu0 0
  %1792 = vmatpush2.bf16.msra.mxu0 0
  %1793 = vmatprep.subr.bf16.mxu0 0
  %1794 = vmatpush2.bf16.msra.mxu0 0
  %1795 = vmatprep.subr.bf16.mxu0 0
  %1796 = vmatpush2.bf16.msra.mxu0 0
  %1797 = vmatprep.subr.bf16.mxu0 0
  %1798 = vmatpush2.bf16.msra.mxu0 0
  %1799 = vmatprep.mubr.bf16.mxu0 0
  %1800 = vmatmul.mubr.bf16.gmra.mxu0 %v1597
  %v1801 = vpop.f32.mrf.mxu0
  %v1802 = vadd.f32 %v1714, %v1801
  %v1803 = vpop.f32.mrf.mxu0
  %v1804 = vpop.f32.mrf.mxu0
  %v1805 = vpop.f32.mrf.mxu0
  %1806 = vdwg.mxu0
  %v1807 = vld [vmem:[%s6] sm:$0x1]
  %v1809 = vlaneseq
  %v1810 = vshrl.u32 %v1809, 7
  %v1811 = vsub.s32 0, %v1810
  %v1812 = vrot.slane %v1807, %v1811
  %v1814 = vadd.f32 %v1802, %v1812
  %v1815 = vmax.f32 %v1814, 0.0
  %v1816 = vpack.c.bf16 %v1815, %v1815
  %v1817 = vld [vmem:[%s7] sm:$0xf]
  %v1818 = vld [vmem:[%s7 + $0x4] sm:$0xf]
  %v1819 = vld [vmem:[%s7 + $0x8] sm:$0xf]
  %v1820 = vld [vmem:[%s7 + $0xc] sm:$0xf]
  %v1821 = vld [vmem:[%s7 + $0x10] sm:$0xf]
  %v1822 = vld [vmem:[%s7 + $0x14] sm:$0xf]
  %v1823 = vld [vmem:[%s7 + $0x18] sm:$0xf]
  %v1824 = vld [vmem:[%s7 + $0x1c] sm:$0xf]
  %v1825 = vld [vmem:[%s7 + $0x20] sm:$0xf]
  %v1826 = vld [vmem:[%s7 + $0x24] sm:$0xf]
  %v1827 = vld [vmem:[%s7 + $0x28] sm:$0xf]
  %v1828 = vld [vmem:[%s7 + $0x2c] sm:$0xf]
  %v1829 = vld [vmem:[%s7 + $0x30] sm:$0xf]
  %v1830 = vld [vmem:[%s7 + $0x34] sm:$0xf]
  %v1831 = vld [vmem:[%s7 + $0x38] sm:$0xf]
  %v1832 = vld [vmem:[%s7 + $0x3c] sm:$0xf]
  %v1833 = vld [vmem:[%s8] sm:$0x1]
  %v1835 = vlaneseq
  %v1836 = vshrl.u32 %v1835, 7
  %v1837 = vsub.s32 0, %v1836
  %v1838 = vrot.slane %v1833, %v1837
  %v1856 = vunpack.c.l.b16 %v1817
  %v1857 = vunpack.c.l.b16 %v1818
  %v1858 = vunpack.c.l.b16 %v1819
  %v1859 = vunpack.c.l.b16 %v1820
  %v1860 = vunpack.c.l.b16 %v1821
  %v1861 = vunpack.c.l.b16 %v1822
  %v1862 = vunpack.c.l.b16 %v1823
  %v1863 = vunpack.c.l.b16 %v1824
  %v1864 = vunpack.c.l.b16 %v1825
  %v1865 = vunpack.c.l.b16 %v1826
  %v1866 = vunpack.c.l.b16 %v1827
  %v1867 = vunpack.c.l.b16 %v1828
  %v1868 = vunpack.c.l.b16 %v1829
  %v1869 = vunpack.c.l.b16 %v1830
  %v1870 = vunpack.c.l.b16 %v1831
  %v1871 = vunpack.c.l.b16 %v1832
  %v1872 = vpack.c.b16 %v1857, %v1856
  %v1873 = vpack.c.b16 %v1859, %v1858
  %v1874 = vpack.c.b16 %v1861, %v1860
  %v1875 = vpack.c.b16 %v1863, %v1862
  %v1876 = vpack.c.b16 %v1865, %v1864
  %v1877 = vpack.c.b16 %v1867, %v1866
  %v1878 = vpack.c.b16 %v1869, %v1868
  %v1879 = vpack.c.b16 %v1871, %v1870
  %1888 = vmatprep.subr.bf16.mxu0 0
  %1889 = vmatpush1.bf16.msra.mxu0 %v1879
  %1890 = vmatprep.subr.bf16.mxu0 0
  %1891 = vmatpush1.bf16.msra.mxu0 %v1878
  %1892 = vmatprep.subr.bf16.mxu0 0
  %1893 = vmatpush1.bf16.msra.mxu0 %v1877
  %1894 = vmatprep.subr.bf16.mxu0 0
  %1895 = vmatpush1.bf16.msra.mxu0 %v1876
  %1896 = vmatprep.subr.bf16.mxu0 0
  %1897 = vmatpush1.bf16.msra.mxu0 %v1875
  %1898 = vmatprep.subr.bf16.mxu0 0
  %1899 = vmatpush1.bf16.msra.mxu0 %v1874
  %1900 = vmatprep.subr.bf16.mxu0 0
  %1901 = vmatpush1.bf16.msra.mxu0 %v1873
  %1902 = vmatprep.subr.bf16.mxu0 0
  %1903 = vmatpush1.bf16.msra.mxu0 %v1872
  %1904 = vmatprep.subr.bf16.mxu0 0
  %1905 = vmatpush2.bf16.msra.mxu0 0
  %1906 = vmatprep.subr.bf16.mxu0 0
  %1907 = vmatpush2.bf16.msra.mxu0 0
  %1908 = vmatprep.subr.bf16.mxu0 0
  %1909 = vmatpush2.bf16.msra.mxu0 0
  %1910 = vmatprep.subr.bf16.mxu0 0
  %1911 = vmatpush2.bf16.msra.mxu0 0
  %1912 = vmatprep.subr.bf16.mxu0 0
  %1913 = vmatpush2.bf16.msra.mxu0 0
  %1914 = vmatprep.subr.bf16.mxu0 0
  %1915 = vmatpush2.bf16.msra.mxu0 0
  %1916 = vmatprep.subr.bf16.mxu0 0
  %1917 = vmatpush2.bf16.msra.mxu0 0
  %1918 = vmatprep.subr.bf16.mxu0 0
  %1919 = vmatpush2.bf16.msra.mxu0 0
  %1920 = vmatprep.mubr.bf16.mxu0 0
  %1921 = vmatmul.mubr.bf16.gmra.mxu0 %v1816
  %v1922 = vpop.f32.mrf.mxu0
  %v1923 = vadd.f32 %v1838, %v1922
  %v1924 = vpop.f32.mrf.mxu0
  %v1925 = vpop.f32.mrf.mxu0
  %v1926 = vpop.f32.mrf.mxu0
  %1927 = vdwg.mxu0
  %1928 = vst [vmem:[%s9] sm:$0xff] %v1923
  // Predicated region
  $region38: #{bilstm_forward.1} parent=0 // pred_check
    _
  $region39: #{bilstm_forward.1} parent=0 // pred_check_branch
    %1930 = sbr.rel (0) target = $region41
  $region40: #{bilstm_forward.1} parent=0 // pred_region
    _
  $region41: #{bilstm_forward.1} parent=0 // pred_fallthru
    _
  // Predicated region
  $region42: #{bilstm_forward.1} parent=0 // pred_check
    _
  $region43: #{bilstm_forward.1} parent=0 // pred_check_branch
    %1932 = sbr.rel (0) target = $region45
  $region44: #{bilstm_forward.1} parent=0 // pred_region
    _
  $region45: #{bilstm_forward.1} parent=0 // pred_fallthru
    _

</llo_original>
